<compile_context>
chip_gen: v7x
topology: tpu7x:2x2x1
jax: 0.10.0
libtpu: 0.0.40
codegen_flags: <defaults>
</compile_context>

<pallas_src>
import jax
import jax.numpy as jnp
from jax import lax
from jax.experimental import pallas as pl
from jax.experimental.pallas import tpu as pltpu


def lstm_kernel(xw_ref, mask_ref, charges_ref,
                w_hh_t_ref, w1h_t_ref, w1c_t_ref, b1_ref,
                w2_t_ref, b2_ref,
                out_ref):
    T, B, _ = xw_ref.shape            # xw: (T, B, 4H), precomputed x@W_ih^T + b
    H = w_hh_t_ref.shape[0]

    w_hh_t = w_hh_t_ref[...]          # (H, 4H), hoisted out of the loop

    def step(t, carry):
        h, c = carry                  # (B, H) register-resident carries
        # Only the recurrent matmul remains on the sequential critical path.
        gates = xw_ref[t] + jnp.dot(h, w_hh_t,
                                    preferred_element_type=jnp.float32)
        # Activate the whole (B, 4H) tile, then take gate slices (i, f, g, o).
        sig = jax.nn.sigmoid(gates)
        th = jnp.tanh(gates)
        i_g = sig[:, 0:H]
        f_g = sig[:, H:2 * H]
        g_g = th[:, 2 * H:3 * H]
        o_g = sig[:, 3 * H:4 * H]
        c_new = f_g * c + i_g * g_g
        h_new = o_g * jnp.tanh(c_new)
        # pack_padded_sequence semantics: freeze h, c once t >= length[b].
        m = mask_ref[t]               # (B, H) float {0, 1}
        h = h + m * (h_new - h)
        c = c + m * (c_new - c)
        return h, c

    h0 = jnp.zeros((B, H), jnp.float32)
    c0 = jnp.zeros((B, H), jnp.float32)
    h_f, _ = lax.fori_loop(0, T, step, (h0, c0), unroll=True)

    # fc1([h, charge]) == h @ W1h^T + charge * W1c^T + b1   (concat split)
    o1 = jnp.maximum(
        jnp.dot(h_f, w1h_t_ref[...], preferred_element_type=jnp.float32)
        + charges_ref[...] * w1c_t_ref[...]
        + b1_ref[...], 0.0)
    out_ref[...] = (jnp.dot(o1, w2_t_ref[...],
                            preferred_element_type=jnp.float32)
                    + b2_ref[...])


def lstm_forward_pallas(tokens, charges, lengths, params):
    emb_table = params["emb"]                       # (V, E), padding row zeroed
    w_ih, w_hh = params["w_ih"], params["w_hh"]     # (4H, E), (4H, H)
    b = params["b_ih"] + params["b_hh"]             # (4H,)
    w1, b1 = params["w1"], params["b1"]             # (H, H+1), (H,)
    w2, b2 = params["w2"], params["b2"]             # (1, H), (1,)

    B, T = tokens.shape
    E = emb_table.shape[1]
    H = w_hh.shape[1]

    # Pad batch to a sublane multiple of 8; padded rows get length 0 and are
    # sliced off at the end. (pack_padded_sequence disallows length==0 for
    # real rows; assert in the caller.)
    Bp = max(8, -(-B // 8) * 8)
    pad = Bp - B
    tokens_p = jnp.pad(tokens.astype(jnp.int32), ((0, pad), (0, 0)))
    lengths_p = jnp.pad(jnp.asarray(lengths).reshape(-1).astype(jnp.int32),
                        ((0, pad),))
    charges_p = jnp.pad(charges.reshape(B, 1).astype(jnp.float32),
                        ((0, pad), (0, 0)))

    # Glue (plain XLA): embedding gather, time-major transpose, and the input
    # projection for ALL timesteps hoisted out of the recurrence.
    x = jnp.take(emb_table, tokens_p, axis=0).astype(jnp.float32)   # (Bp,T,E)
    x = jnp.transpose(x, (1, 0, 2))                                 # (T,Bp,E)
    w_ih_t = jnp.transpose(w_ih)                                    # (E,4H)
    xw = jnp.einsum('tbe,eg->tbg', x, w_ih_t) + b[None, None, :]    # (T,Bp,4H)

    # Precomputed freeze mask, broadcast once outside the kernel.
    mask = (jnp.arange(T)[:, None] < lengths_p[None, :]).astype(jnp.float32)
    mask = jnp.broadcast_to(mask[:, :, None], (T, Bp, H))           # (T,Bp,H)

    w_hh_t = jnp.transpose(w_hh)                    # (H, 4H)
    w1h_t = jnp.transpose(w1[:, :H])                # (H, H)
    w1c_t = jnp.transpose(w1[:, H:])                # (1, H)
    b1_r = b1[None, :]                              # (1, H)
    w2_t = jnp.transpose(w2)                        # (H, 1)
    b2_r = b2[None, :]                              # (1, 1)

    vmem = pl.BlockSpec(memory_space=pltpu.MemorySpace.VMEM)
    out = pl.pallas_call(
        lstm_kernel,
        out_shape=jax.ShapeDtypeStruct((Bp, 1), jnp.float32),
        in_specs=[vmem] * 9,
        out_specs=vmem,
    )(xw, mask, charges_p, w_hh_t, w1h_t, w1c_t, b1_r, w2_t, b2_r)
    return out[:B]


def lstm_forward_ref(tokens, charges, lengths, params):
    """Plain-JAX reference mirroring the PyTorch forward."""
    emb = jnp.take(params["emb"], tokens, axis=0)   # (B, T, E)
    B, T, _ = emb.shape
    H = params["w_hh"].shape[1]
    x_tm = jnp.transpose(emb, (1, 0, 2))

    def step(carry, xs):
        h, c = carry
        x_t, t = xs
        gates = (x_t @ params["w_ih"].T + h @ params["w_hh"].T
                 + params["b_ih"] + params["b_hh"])
        i = jax.nn.sigmoid(gates[:, :H])
        f = jax.nn.sigmoid(gates[:, H:2 * H])
        g = jnp.tanh(gates[:, 2 * H:3 * H])
        o = jax.nn.sigmoid(gates[:, 3 * H:])
        c_new = f * c + i * g
        h_new = o * jnp.tanh(c_new)
        m = (lengths > t)[:, None]
        return (jnp.where(m, h_new, h), jnp.where(m, c_new, c)), None

    (h, _), _ = jax.lax.scan(
        step, (jnp.zeros((B, H), jnp.float32), jnp.zeros((B, H), jnp.float32)),
        (x_tm, jnp.arange(T)))
    lstm_out = jnp.concatenate([h, charges], axis=1)
    o1 = jax.nn.relu(lstm_out @ params["w1"].T + params["b1"])
    return o1 @ params["w2"].T + params["b2"]


def init_params(key, vocab_size, pad_idx, E, H):
    ks = jax.random.split(key, 9)
    s = 0.1
    emb = s * jax.random.normal(ks[0], (vocab_size, E), jnp.float32)
    emb = emb.at[pad_idx].set(0.0)                  # padding_idx row -> zeros
    return {
        "emb": emb,
        "w_ih": s * jax.random.normal(ks[1], (4 * H, E), jnp.float32),
        "w_hh": s * jax.random.normal(ks[2], (4 * H, H), jnp.float32),
        "b_ih": s * jax.random.normal(ks[3], (4 * H,), jnp.float32),
        "b_hh": s * jax.random.normal(ks[4], (4 * H,), jnp.float32),
        "w1": s * jax.random.normal(ks[5], (H, H + 1), jnp.float32),
        "b1": s * jax.random.normal(ks[6], (H,), jnp.float32),
        "w2": s * jax.random.normal(ks[7], (1, H), jnp.float32),
        "b2": s * jax.random.normal(ks[8], (1,), jnp.float32),
    }


if __name__ == "__main__":
    # vocab: 20 amino acids + padding token '-'
    vocab = {c: i for i, c in enumerate("ACDEFGHIKLMNPQRSTVWY-")}
    pad_idx = vocab["-"]
    E, H = 16, 32
    B, T = 4, 10

    root = jax.random.PRNGKey(0)
    k_params, k_tok, k_chg = jax.random.split(root, 3)
    params = init_params(k_params, len(vocab), pad_idx, E, H)

    # lengths sorted descending (pack_padded_sequence default enforce_sorted)
    lengths = jnp.array([10, 8, 5, 3], dtype=jnp.int32)
    assert int(jnp.min(lengths)) > 0, "pack_padded_sequence requires lengths > 0"
    tokens = jax.random.randint(k_tok, (B, T), 0, pad_idx, dtype=jnp.int32)
    time_idx = jnp.arange(T)[None, :]
    tokens = jnp.where(time_idx < lengths[:, None], tokens, pad_idx)
    charges = jax.random.uniform(k_chg, (B, 1), jnp.float32, 1.0, 4.0)

    out = lstm_forward_pallas(tokens, charges, lengths, params)
    out = jax.block_until_ready(out)

    ref = lstm_forward_ref(tokens, charges, lengths, params)
    assert out.shape == (B, 1)
    assert jnp.allclose(out, ref, atol=1e-4, rtol=1e-4), (out, ref)
    print("KERNEL_OK")
</pallas_src>

<mosaic_0001>
module attributes {stable_mosaic.version = 11 : i64} {
  func.func @lstm_kernel(%arg0: memref<10x8x128xf32, #tpu.memory_space<vmem>>, %arg1: memref<10x8x32xf32, #tpu.memory_space<vmem>>, %arg2: memref<8x1xf32, #tpu.memory_space<vmem>>, %arg3: memref<32x128xf32, #tpu.memory_space<vmem>>, %arg4: memref<32x32xf32, #tpu.memory_space<vmem>>, %arg5: memref<1x32xf32, #tpu.memory_space<vmem>>, %arg6: memref<1x32xf32, #tpu.memory_space<vmem>>, %arg7: memref<32x1xf32, #tpu.memory_space<vmem>>, %arg8: memref<1x1xf32, #tpu.memory_space<vmem>>, %arg9: memref<8x1xf32, #tpu.memory_space<vmem>>) attributes {dimension_semantics = [], scalar_prefetch = 0 : i64, scratch_operands = 0 : i64, tpu.core_type = #tpu.core_type<tc>} {
    %c0 = arith.constant 0 : index
    %c0_0 = arith.constant 0 : index
    %0 = vector.load %arg3[%c0, %c0_0] : memref<32x128xf32, #tpu.memory_space<vmem>>, vector<32x128xf32>
    %cst = arith.constant 0.000000e+00 : f32
    %1 = vector.broadcast %cst : f32 to vector<8x32xf32>
    %cst_1 = arith.constant 0.000000e+00 : f32
    %2 = vector.broadcast %cst_1 : f32 to vector<8x32xf32>
    %c0_i32 = arith.constant 0 : i32
    %3 = arith.index_cast %c0_i32 : i32 to index
    %c0_2 = arith.constant 0 : index
    %c0_3 = arith.constant 0 : index
    %4 = vector.load %arg0[%3, %c0_2, %c0_3] : memref<10x8x128xf32, #tpu.memory_space<vmem>>, vector<1x8x128xf32>
    %5 = vector.shape_cast %4 : vector<1x8x128xf32> to vector<8x128xf32>
    %cst_4 = arith.constant dense<0.000000e+00> : vector<8x128xf32>
    %6 = tpu.matmul %1, %0, %cst_4 {dimension_numbers = #tpu.dot_dimension_numbers<[1], [0], [0], [1], [0, 0, 1, 1], [], []>} : vector<8x32xf32>, vector<32x128xf32>, vector<8x128xf32> -> vector<8x128xf32>
    %7 = arith.addf %5, %6 : vector<8x128xf32>
    %8 = arith.negf %7 : vector<8x128xf32>
    %9 = math.exp %8 : vector<8x128xf32>
    %cst_5 = arith.constant 1.000000e+00 : f32
    %10 = vector.broadcast %cst_5 : f32 to vector<8x128xf32>
    %11 = arith.addf %10, %9 : vector<8x128xf32>
    %12 = arith.divf %10, %11 : vector<8x128xf32>
    %13 = math.tanh %7 : vector<8x128xf32>
    %14 = vector.extract_strided_slice %12 {offsets = [0, 0], sizes = [8, 32], strides = [1, 1]} : vector<8x128xf32> to vector<8x32xf32>
    %15 = vector.extract_strided_slice %12 {offsets = [0, 32], sizes = [8, 32], strides = [1, 1]} : vector<8x128xf32> to vector<8x32xf32>
    %16 = vector.extract_strided_slice %13 {offsets = [0, 64], sizes = [8, 32], strides = [1, 1]} : vector<8x128xf32> to vector<8x32xf32>
    %17 = vector.extract_strided_slice %12 {offsets = [0, 96], sizes = [8, 32], strides = [1, 1]} : vector<8x128xf32> to vector<8x32xf32>
    %18 = arith.mulf %15, %2 : vector<8x32xf32>
    %19 = arith.mulf %14, %16 : vector<8x32xf32>
    %20 = arith.addf %18, %19 : vector<8x32xf32>
    %21 = math.tanh %20 : vector<8x32xf32>
    %22 = arith.mulf %17, %21 : vector<8x32xf32>
    %23 = arith.index_cast %c0_i32 : i32 to index
    %c0_6 = arith.constant 0 : index
    %c0_7 = arith.constant 0 : index
    %24 = vector.load %arg1[%23, %c0_6, %c0_7] : memref<10x8x32xf32, #tpu.memory_space<vmem>>, vector<1x8x32xf32>
    %25 = vector.shape_cast %24 : vector<1x8x32xf32> to vector<8x32xf32>
    %26 = arith.subf %22, %1 : vector<8x32xf32>
    %27 = arith.mulf %25, %26 : vector<8x32xf32>
    %28 = arith.addf %1, %27 : vector<8x32xf32>
    %29 = arith.subf %20, %2 : vector<8x32xf32>
    %30 = arith.mulf %25, %29 : vector<8x32xf32>
    %31 = arith.addf %2, %30 : vector<8x32xf32>
    %c1_i32 = arith.constant 1 : i32
    %32 = arith.index_cast %c1_i32 : i32 to index
    %c0_8 = arith.constant 0 : index
    %c0_9 = arith.constant 0 : index
    %33 = vector.load %arg0[%32, %c0_8, %c0_9] : memref<10x8x128xf32, #tpu.memory_space<vmem>>, vector<1x8x128xf32>
    %34 = vector.shape_cast %33 : vector<1x8x128xf32> to vector<8x128xf32>
    %cst_10 = arith.constant dense<0.000000e+00> : vector<8x128xf32>
    %35 = tpu.matmul %28, %0, %cst_10 {dimension_numbers = #tpu.dot_dimension_numbers<[1], [0], [0], [1], [0, 0, 1, 1], [], []>} : vector<8x32xf32>, vector<32x128xf32>, vector<8x128xf32> -> vector<8x128xf32>
    %36 = arith.addf %34, %35 : vector<8x128xf32>
    %37 = arith.negf %36 : vector<8x128xf32>
    %38 = math.exp %37 : vector<8x128xf32>
    %cst_11 = arith.constant 1.000000e+00 : f32
    %39 = vector.broadcast %cst_11 : f32 to vector<8x128xf32>
    %40 = arith.addf %39, %38 : vector<8x128xf32>
    %41 = arith.divf %39, %40 : vector<8x128xf32>
    %42 = math.tanh %36 : vector<8x128xf32>
    %43 = vector.extract_strided_slice %41 {offsets = [0, 0], sizes = [8, 32], strides = [1, 1]} : vector<8x128xf32> to vector<8x32xf32>
    %44 = vector.extract_strided_slice %41 {offsets = [0, 32], sizes = [8, 32], strides = [1, 1]} : vector<8x128xf32> to vector<8x32xf32>
    %45 = vector.extract_strided_slice %42 {offsets = [0, 64], sizes = [8, 32], strides = [1, 1]} : vector<8x128xf32> to vector<8x32xf32>
    %46 = vector.extract_strided_slice %41 {offsets = [0, 96], sizes = [8, 32], strides = [1, 1]} : vector<8x128xf32> to vector<8x32xf32>
    %47 = arith.mulf %44, %31 : vector<8x32xf32>
    %48 = arith.mulf %43, %45 : vector<8x32xf32>
    %49 = arith.addf %47, %48 : vector<8x32xf32>
    %50 = math.tanh %49 : vector<8x32xf32>
    %51 = arith.mulf %46, %50 : vector<8x32xf32>
    %52 = arith.index_cast %c1_i32 : i32 to index
    %c0_12 = arith.constant 0 : index
    %c0_13 = arith.constant 0 : index
    %53 = vector.load %arg1[%52, %c0_12, %c0_13] : memref<10x8x32xf32, #tpu.memory_space<vmem>>, vector<1x8x32xf32>
    %54 = vector.shape_cast %53 : vector<1x8x32xf32> to vector<8x32xf32>
    %55 = arith.subf %51, %28 : vector<8x32xf32>
    %56 = arith.mulf %54, %55 : vector<8x32xf32>
    %57 = arith.addf %28, %56 : vector<8x32xf32>
    %58 = arith.subf %49, %31 : vector<8x32xf32>
    %59 = arith.mulf %54, %58 : vector<8x32xf32>
    %60 = arith.addf %31, %59 : vector<8x32xf32>
    %c2_i32 = arith.constant 2 : i32
    %61 = arith.index_cast %c2_i32 : i32 to index
    %c0_14 = arith.constant 0 : index
    %c0_15 = arith.constant 0 : index
    %62 = vector.load %arg0[%61, %c0_14, %c0_15] : memref<10x8x128xf32, #tpu.memory_space<vmem>>, vector<1x8x128xf32>
    %63 = vector.shape_cast %62 : vector<1x8x128xf32> to vector<8x128xf32>
    %cst_16 = arith.constant dense<0.000000e+00> : vector<8x128xf32>
    %64 = tpu.matmul %57, %0, %cst_16 {dimension_numbers = #tpu.dot_dimension_numbers<[1], [0], [0], [1], [0, 0, 1, 1], [], []>} : vector<8x32xf32>, vector<32x128xf32>, vector<8x128xf32> -> vector<8x128xf32>
    %65 = arith.addf %63, %64 : vector<8x128xf32>
    %66 = arith.negf %65 : vector<8x128xf32>
    %67 = math.exp %66 : vector<8x128xf32>
    %cst_17 = arith.constant 1.000000e+00 : f32
    %68 = vector.broadcast %cst_17 : f32 to vector<8x128xf32>
    %69 = arith.addf %68, %67 : vector<8x128xf32>
    %70 = arith.divf %68, %69 : vector<8x128xf32>
    %71 = math.tanh %65 : vector<8x128xf32>
    %72 = vector.extract_strided_slice %70 {offsets = [0, 0], sizes = [8, 32], strides = [1, 1]} : vector<8x128xf32> to vector<8x32xf32>
    %73 = vector.extract_strided_slice %70 {offsets = [0, 32], sizes = [8, 32], strides = [1, 1]} : vector<8x128xf32> to vector<8x32xf32>
    %74 = vector.extract_strided_slice %71 {offsets = [0, 64], sizes = [8, 32], strides = [1, 1]} : vector<8x128xf32> to vector<8x32xf32>
    %75 = vector.extract_strided_slice %70 {offsets = [0, 96], sizes = [8, 32], strides = [1, 1]} : vector<8x128xf32> to vector<8x32xf32>
    %76 = arith.mulf %73, %60 : vector<8x32xf32>
    %77 = arith.mulf %72, %74 : vector<8x32xf32>
    %78 = arith.addf %76, %77 : vector<8x32xf32>
    %79 = math.tanh %78 : vector<8x32xf32>
    %80 = arith.mulf %75, %79 : vector<8x32xf32>
    %81 = arith.index_cast %c2_i32 : i32 to index
    %c0_18 = arith.constant 0 : index
    %c0_19 = arith.constant 0 : index
    %82 = vector.load %arg1[%81, %c0_18, %c0_19] : memref<10x8x32xf32, #tpu.memory_space<vmem>>, vector<1x8x32xf32>
    %83 = vector.shape_cast %82 : vector<1x8x32xf32> to vector<8x32xf32>
    %84 = arith.subf %80, %57 : vector<8x32xf32>
    %85 = arith.mulf %83, %84 : vector<8x32xf32>
    %86 = arith.addf %57, %85 : vector<8x32xf32>
    %87 = arith.subf %78, %60 : vector<8x32xf32>
    %88 = arith.mulf %83, %87 : vector<8x32xf32>
    %89 = arith.addf %60, %88 : vector<8x32xf32>
    %c3_i32 = arith.constant 3 : i32
    %90 = arith.index_cast %c3_i32 : i32 to index
    %c0_20 = arith.constant 0 : index
    %c0_21 = arith.constant 0 : index
    %91 = vector.load %arg0[%90, %c0_20, %c0_21] : memref<10x8x128xf32, #tpu.memory_space<vmem>>, vector<1x8x128xf32>
    %92 = vector.shape_cast %91 : vector<1x8x128xf32> to vector<8x128xf32>
    %cst_22 = arith.constant dense<0.000000e+00> : vector<8x128xf32>
    %93 = tpu.matmul %86, %0, %cst_22 {dimension_numbers = #tpu.dot_dimension_numbers<[1], [0], [0], [1], [0, 0, 1, 1], [], []>} : vector<8x32xf32>, vector<32x128xf32>, vector<8x128xf32> -> vector<8x128xf32>
    %94 = arith.addf %92, %93 : vector<8x128xf32>
    %95 = arith.negf %94 : vector<8x128xf32>
    %96 = math.exp %95 : vector<8x128xf32>
    %cst_23 = arith.constant 1.000000e+00 : f32
    %97 = vector.broadcast %cst_23 : f32 to vector<8x128xf32>
    %98 = arith.addf %97, %96 : vector<8x128xf32>
    %99 = arith.divf %97, %98 : vector<8x128xf32>
    %100 = math.tanh %94 : vector<8x128xf32>
    %101 = vector.extract_strided_slice %99 {offsets = [0, 0], sizes = [8, 32], strides = [1, 1]} : vector<8x128xf32> to vector<8x32xf32>
    %102 = vector.extract_strided_slice %99 {offsets = [0, 32], sizes = [8, 32], strides = [1, 1]} : vector<8x128xf32> to vector<8x32xf32>
    %103 = vector.extract_strided_slice %100 {offsets = [0, 64], sizes = [8, 32], strides = [1, 1]} : vector<8x128xf32> to vector<8x32xf32>
    %104 = vector.extract_strided_slice %99 {offsets = [0, 96], sizes = [8, 32], strides = [1, 1]} : vector<8x128xf32> to vector<8x32xf32>
    %105 = arith.mulf %102, %89 : vector<8x32xf32>
    %106 = arith.mulf %101, %103 : vector<8x32xf32>
    %107 = arith.addf %105, %106 : vector<8x32xf32>
    %108 = math.tanh %107 : vector<8x32xf32>
    %109 = arith.mulf %104, %108 : vector<8x32xf32>
    %110 = arith.index_cast %c3_i32 : i32 to index
    %c0_24 = arith.constant 0 : index
    %c0_25 = arith.constant 0 : index
    %111 = vector.load %arg1[%110, %c0_24, %c0_25] : memref<10x8x32xf32, #tpu.memory_space<vmem>>, vector<1x8x32xf32>
    %112 = vector.shape_cast %111 : vector<1x8x32xf32> to vector<8x32xf32>
    %113 = arith.subf %109, %86 : vector<8x32xf32>
    %114 = arith.mulf %112, %113 : vector<8x32xf32>
    %115 = arith.addf %86, %114 : vector<8x32xf32>
    %116 = arith.subf %107, %89 : vector<8x32xf32>
    %117 = arith.mulf %112, %116 : vector<8x32xf32>
    %118 = arith.addf %89, %117 : vector<8x32xf32>
    %c4_i32 = arith.constant 4 : i32
    %119 = arith.index_cast %c4_i32 : i32 to index
    %c0_26 = arith.constant 0 : index
    %c0_27 = arith.constant 0 : index
    %120 = vector.load %arg0[%119, %c0_26, %c0_27] : memref<10x8x128xf32, #tpu.memory_space<vmem>>, vector<1x8x128xf32>
    %121 = vector.shape_cast %120 : vector<1x8x128xf32> to vector<8x128xf32>
    %cst_28 = arith.constant dense<0.000000e+00> : vector<8x128xf32>
    %122 = tpu.matmul %115, %0, %cst_28 {dimension_numbers = #tpu.dot_dimension_numbers<[1], [0], [0], [1], [0, 0, 1, 1], [], []>} : vector<8x32xf32>, vector<32x128xf32>, vector<8x128xf32> -> vector<8x128xf32>
    %123 = arith.addf %121, %122 : vector<8x128xf32>
    %124 = arith.negf %123 : vector<8x128xf32>
    %125 = math.exp %124 : vector<8x128xf32>
    %cst_29 = arith.constant 1.000000e+00 : f32
    %126 = vector.broadcast %cst_29 : f32 to vector<8x128xf32>
    %127 = arith.addf %126, %125 : vector<8x128xf32>
    %128 = arith.divf %126, %127 : vector<8x128xf32>
    %129 = math.tanh %123 : vector<8x128xf32>
    %130 = vector.extract_strided_slice %128 {offsets = [0, 0], sizes = [8, 32], strides = [1, 1]} : vector<8x128xf32> to vector<8x32xf32>
    %131 = vector.extract_strided_slice %128 {offsets = [0, 32], sizes = [8, 32], strides = [1, 1]} : vector<8x128xf32> to vector<8x32xf32>
    %132 = vector.extract_strided_slice %129 {offsets = [0, 64], sizes = [8, 32], strides = [1, 1]} : vector<8x128xf32> to vector<8x32xf32>
    %133 = vector.extract_strided_slice %128 {offsets = [0, 96], sizes = [8, 32], strides = [1, 1]} : vector<8x128xf32> to vector<8x32xf32>
    %134 = arith.mulf %131, %118 : vector<8x32xf32>
    %135 = arith.mulf %130, %132 : vector<8x32xf32>
    %136 = arith.addf %134, %135 : vector<8x32xf32>
    %137 = math.tanh %136 : vector<8x32xf32>
    %138 = arith.mulf %133, %137 : vector<8x32xf32>
    %139 = arith.index_cast %c4_i32 : i32 to index
    %c0_30 = arith.constant 0 : index
    %c0_31 = arith.constant 0 : index
    %140 = vector.load %arg1[%139, %c0_30, %c0_31] : memref<10x8x32xf32, #tpu.memory_space<vmem>>, vector<1x8x32xf32>
    %141 = vector.shape_cast %140 : vector<1x8x32xf32> to vector<8x32xf32>
    %142 = arith.subf %138, %115 : vector<8x32xf32>
    %143 = arith.mulf %141, %142 : vector<8x32xf32>
    %144 = arith.addf %115, %143 : vector<8x32xf32>
    %145 = arith.subf %136, %118 : vector<8x32xf32>
    %146 = arith.mulf %141, %145 : vector<8x32xf32>
    %147 = arith.addf %118, %146 : vector<8x32xf32>
    %c5_i32 = arith.constant 5 : i32
    %148 = arith.index_cast %c5_i32 : i32 to index
    %c0_32 = arith.constant 0 : index
    %c0_33 = arith.constant 0 : index
    %149 = vector.load %arg0[%148, %c0_32, %c0_33] : memref<10x8x128xf32, #tpu.memory_space<vmem>>, vector<1x8x128xf32>
    %150 = vector.shape_cast %149 : vector<1x8x128xf32> to vector<8x128xf32>
    %cst_34 = arith.constant dense<0.000000e+00> : vector<8x128xf32>
    %151 = tpu.matmul %144, %0, %cst_34 {dimension_numbers = #tpu.dot_dimension_numbers<[1], [0], [0], [1], [0, 0, 1, 1], [], []>} : vector<8x32xf32>, vector<32x128xf32>, vector<8x128xf32> -> vector<8x128xf32>
    %152 = arith.addf %150, %151 : vector<8x128xf32>
    %153 = arith.negf %152 : vector<8x128xf32>
    %154 = math.exp %153 : vector<8x128xf32>
    %cst_35 = arith.constant 1.000000e+00 : f32
    %155 = vector.broadcast %cst_35 : f32 to vector<8x128xf32>
    %156 = arith.addf %155, %154 : vector<8x128xf32>
    %157 = arith.divf %155, %156 : vector<8x128xf32>
    %158 = math.tanh %152 : vector<8x128xf32>
    %159 = vector.extract_strided_slice %157 {offsets = [0, 0], sizes = [8, 32], strides = [1, 1]} : vector<8x128xf32> to vector<8x32xf32>
    %160 = vector.extract_strided_slice %157 {offsets = [0, 32], sizes = [8, 32], strides = [1, 1]} : vector<8x128xf32> to vector<8x32xf32>
    %161 = vector.extract_strided_slice %158 {offsets = [0, 64], sizes = [8, 32], strides = [1, 1]} : vector<8x128xf32> to vector<8x32xf32>
    %162 = vector.extract_strided_slice %157 {offsets = [0, 96], sizes = [8, 32], strides = [1, 1]} : vector<8x128xf32> to vector<8x32xf32>
    %163 = arith.mulf %160, %147 : vector<8x32xf32>
    %164 = arith.mulf %159, %161 : vector<8x32xf32>
    %165 = arith.addf %163, %164 : vector<8x32xf32>
    %166 = math.tanh %165 : vector<8x32xf32>
    %167 = arith.mulf %162, %166 : vector<8x32xf32>
    %168 = arith.index_cast %c5_i32 : i32 to index
    %c0_36 = arith.constant 0 : index
    %c0_37 = arith.constant 0 : index
    %169 = vector.load %arg1[%168, %c0_36, %c0_37] : memref<10x8x32xf32, #tpu.memory_space<vmem>>, vector<1x8x32xf32>
    %170 = vector.shape_cast %169 : vector<1x8x32xf32> to vector<8x32xf32>
    %171 = arith.subf %167, %144 : vector<8x32xf32>
    %172 = arith.mulf %170, %171 : vector<8x32xf32>
    %173 = arith.addf %144, %172 : vector<8x32xf32>
    %174 = arith.subf %165, %147 : vector<8x32xf32>
    %175 = arith.mulf %170, %174 : vector<8x32xf32>
    %176 = arith.addf %147, %175 : vector<8x32xf32>
    %c6_i32 = arith.constant 6 : i32
    %177 = arith.index_cast %c6_i32 : i32 to index
    %c0_38 = arith.constant 0 : index
    %c0_39 = arith.constant 0 : index
    %178 = vector.load %arg0[%177, %c0_38, %c0_39] : memref<10x8x128xf32, #tpu.memory_space<vmem>>, vector<1x8x128xf32>
    %179 = vector.shape_cast %178 : vector<1x8x128xf32> to vector<8x128xf32>
    %cst_40 = arith.constant dense<0.000000e+00> : vector<8x128xf32>
    %180 = tpu.matmul %173, %0, %cst_40 {dimension_numbers = #tpu.dot_dimension_numbers<[1], [0], [0], [1], [0, 0, 1, 1], [], []>} : vector<8x32xf32>, vector<32x128xf32>, vector<8x128xf32> -> vector<8x128xf32>
    %181 = arith.addf %179, %180 : vector<8x128xf32>
    %182 = arith.negf %181 : vector<8x128xf32>
    %183 = math.exp %182 : vector<8x128xf32>
    %cst_41 = arith.constant 1.000000e+00 : f32
    %184 = vector.broadcast %cst_41 : f32 to vector<8x128xf32>
    %185 = arith.addf %184, %183 : vector<8x128xf32>
    %186 = arith.divf %184, %185 : vector<8x128xf32>
    %187 = math.tanh %181 : vector<8x128xf32>
    %188 = vector.extract_strided_slice %186 {offsets = [0, 0], sizes = [8, 32], strides = [1, 1]} : vector<8x128xf32> to vector<8x32xf32>
    %189 = vector.extract_strided_slice %186 {offsets = [0, 32], sizes = [8, 32], strides = [1, 1]} : vector<8x128xf32> to vector<8x32xf32>
    %190 = vector.extract_strided_slice %187 {offsets = [0, 64], sizes = [8, 32], strides = [1, 1]} : vector<8x128xf32> to vector<8x32xf32>
    %191 = vector.extract_strided_slice %186 {offsets = [0, 96], sizes = [8, 32], strides = [1, 1]} : vector<8x128xf32> to vector<8x32xf32>
    %192 = arith.mulf %189, %176 : vector<8x32xf32>
    %193 = arith.mulf %188, %190 : vector<8x32xf32>
    %194 = arith.addf %192, %193 : vector<8x32xf32>
    %195 = math.tanh %194 : vector<8x32xf32>
    %196 = arith.mulf %191, %195 : vector<8x32xf32>
    %197 = arith.index_cast %c6_i32 : i32 to index
    %c0_42 = arith.constant 0 : index
    %c0_43 = arith.constant 0 : index
    %198 = vector.load %arg1[%197, %c0_42, %c0_43] : memref<10x8x32xf32, #tpu.memory_space<vmem>>, vector<1x8x32xf32>
    %199 = vector.shape_cast %198 : vector<1x8x32xf32> to vector<8x32xf32>
    %200 = arith.subf %196, %173 : vector<8x32xf32>
    %201 = arith.mulf %199, %200 : vector<8x32xf32>
    %202 = arith.addf %173, %201 : vector<8x32xf32>
    %203 = arith.subf %194, %176 : vector<8x32xf32>
    %204 = arith.mulf %199, %203 : vector<8x32xf32>
    %205 = arith.addf %176, %204 : vector<8x32xf32>
    %c7_i32 = arith.constant 7 : i32
    %206 = arith.index_cast %c7_i32 : i32 to index
    %c0_44 = arith.constant 0 : index
    %c0_45 = arith.constant 0 : index
    %207 = vector.load %arg0[%206, %c0_44, %c0_45] : memref<10x8x128xf32, #tpu.memory_space<vmem>>, vector<1x8x128xf32>
    %208 = vector.shape_cast %207 : vector<1x8x128xf32> to vector<8x128xf32>
    %cst_46 = arith.constant dense<0.000000e+00> : vector<8x128xf32>
    %209 = tpu.matmul %202, %0, %cst_46 {dimension_numbers = #tpu.dot_dimension_numbers<[1], [0], [0], [1], [0, 0, 1, 1], [], []>} : vector<8x32xf32>, vector<32x128xf32>, vector<8x128xf32> -> vector<8x128xf32>
    %210 = arith.addf %208, %209 : vector<8x128xf32>
    %211 = arith.negf %210 : vector<8x128xf32>
    %212 = math.exp %211 : vector<8x128xf32>
    %cst_47 = arith.constant 1.000000e+00 : f32
    %213 = vector.broadcast %cst_47 : f32 to vector<8x128xf32>
    %214 = arith.addf %213, %212 : vector<8x128xf32>
    %215 = arith.divf %213, %214 : vector<8x128xf32>
    %216 = math.tanh %210 : vector<8x128xf32>
    %217 = vector.extract_strided_slice %215 {offsets = [0, 0], sizes = [8, 32], strides = [1, 1]} : vector<8x128xf32> to vector<8x32xf32>
    %218 = vector.extract_strided_slice %215 {offsets = [0, 32], sizes = [8, 32], strides = [1, 1]} : vector<8x128xf32> to vector<8x32xf32>
    %219 = vector.extract_strided_slice %216 {offsets = [0, 64], sizes = [8, 32], strides = [1, 1]} : vector<8x128xf32> to vector<8x32xf32>
    %220 = vector.extract_strided_slice %215 {offsets = [0, 96], sizes = [8, 32], strides = [1, 1]} : vector<8x128xf32> to vector<8x32xf32>
    %221 = arith.mulf %218, %205 : vector<8x32xf32>
    %222 = arith.mulf %217, %219 : vector<8x32xf32>
    %223 = arith.addf %221, %222 : vector<8x32xf32>
    %224 = math.tanh %223 : vector<8x32xf32>
    %225 = arith.mulf %220, %224 : vector<8x32xf32>
    %226 = arith.index_cast %c7_i32 : i32 to index
    %c0_48 = arith.constant 0 : index
    %c0_49 = arith.constant 0 : index
    %227 = vector.load %arg1[%226, %c0_48, %c0_49] : memref<10x8x32xf32, #tpu.memory_space<vmem>>, vector<1x8x32xf32>
    %228 = vector.shape_cast %227 : vector<1x8x32xf32> to vector<8x32xf32>
    %229 = arith.subf %225, %202 : vector<8x32xf32>
    %230 = arith.mulf %228, %229 : vector<8x32xf32>
    %231 = arith.addf %202, %230 : vector<8x32xf32>
    %232 = arith.subf %223, %205 : vector<8x32xf32>
    %233 = arith.mulf %228, %232 : vector<8x32xf32>
    %234 = arith.addf %205, %233 : vector<8x32xf32>
    %c8_i32 = arith.constant 8 : i32
    %235 = arith.index_cast %c8_i32 : i32 to index
    %c0_50 = arith.constant 0 : index
    %c0_51 = arith.constant 0 : index
    %236 = vector.load %arg0[%235, %c0_50, %c0_51] : memref<10x8x128xf32, #tpu.memory_space<vmem>>, vector<1x8x128xf32>
    %237 = vector.shape_cast %236 : vector<1x8x128xf32> to vector<8x128xf32>
    %cst_52 = arith.constant dense<0.000000e+00> : vector<8x128xf32>
    %238 = tpu.matmul %231, %0, %cst_52 {dimension_numbers = #tpu.dot_dimension_numbers<[1], [0], [0], [1], [0, 0, 1, 1], [], []>} : vector<8x32xf32>, vector<32x128xf32>, vector<8x128xf32> -> vector<8x128xf32>
    %239 = arith.addf %237, %238 : vector<8x128xf32>
    %240 = arith.negf %239 : vector<8x128xf32>
    %241 = math.exp %240 : vector<8x128xf32>
    %cst_53 = arith.constant 1.000000e+00 : f32
    %242 = vector.broadcast %cst_53 : f32 to vector<8x128xf32>
    %243 = arith.addf %242, %241 : vector<8x128xf32>
    %244 = arith.divf %242, %243 : vector<8x128xf32>
    %245 = math.tanh %239 : vector<8x128xf32>
    %246 = vector.extract_strided_slice %244 {offsets = [0, 0], sizes = [8, 32], strides = [1, 1]} : vector<8x128xf32> to vector<8x32xf32>
    %247 = vector.extract_strided_slice %244 {offsets = [0, 32], sizes = [8, 32], strides = [1, 1]} : vector<8x128xf32> to vector<8x32xf32>
    %248 = vector.extract_strided_slice %245 {offsets = [0, 64], sizes = [8, 32], strides = [1, 1]} : vector<8x128xf32> to vector<8x32xf32>
    %249 = vector.extract_strided_slice %244 {offsets = [0, 96], sizes = [8, 32], strides = [1, 1]} : vector<8x128xf32> to vector<8x32xf32>
    %250 = arith.mulf %247, %234 : vector<8x32xf32>
    %251 = arith.mulf %246, %248 : vector<8x32xf32>
    %252 = arith.addf %250, %251 : vector<8x32xf32>
    %253 = math.tanh %252 : vector<8x32xf32>
    %254 = arith.mulf %249, %253 : vector<8x32xf32>
    %255 = arith.index_cast %c8_i32 : i32 to index
    %c0_54 = arith.constant 0 : index
    %c0_55 = arith.constant 0 : index
    %256 = vector.load %arg1[%255, %c0_54, %c0_55] : memref<10x8x32xf32, #tpu.memory_space<vmem>>, vector<1x8x32xf32>
    %257 = vector.shape_cast %256 : vector<1x8x32xf32> to vector<8x32xf32>
    %258 = arith.subf %254, %231 : vector<8x32xf32>
    %259 = arith.mulf %257, %258 : vector<8x32xf32>
    %260 = arith.addf %231, %259 : vector<8x32xf32>
    %261 = arith.subf %252, %234 : vector<8x32xf32>
    %262 = arith.mulf %257, %261 : vector<8x32xf32>
    %263 = arith.addf %234, %262 : vector<8x32xf32>
    %c9_i32 = arith.constant 9 : i32
    %264 = arith.index_cast %c9_i32 : i32 to index
    %c0_56 = arith.constant 0 : index
    %c0_57 = arith.constant 0 : index
    %265 = vector.load %arg0[%264, %c0_56, %c0_57] : memref<10x8x128xf32, #tpu.memory_space<vmem>>, vector<1x8x128xf32>
    %266 = vector.shape_cast %265 : vector<1x8x128xf32> to vector<8x128xf32>
    %cst_58 = arith.constant dense<0.000000e+00> : vector<8x128xf32>
    %267 = tpu.matmul %260, %0, %cst_58 {dimension_numbers = #tpu.dot_dimension_numbers<[1], [0], [0], [1], [0, 0, 1, 1], [], []>} : vector<8x32xf32>, vector<32x128xf32>, vector<8x128xf32> -> vector<8x128xf32>
    %268 = arith.addf %266, %267 : vector<8x128xf32>
    %269 = arith.negf %268 : vector<8x128xf32>
    %270 = math.exp %269 : vector<8x128xf32>
    %cst_59 = arith.constant 1.000000e+00 : f32
    %271 = vector.broadcast %cst_59 : f32 to vector<8x128xf32>
    %272 = arith.addf %271, %270 : vector<8x128xf32>
    %273 = arith.divf %271, %272 : vector<8x128xf32>
    %274 = math.tanh %268 : vector<8x128xf32>
    %275 = vector.extract_strided_slice %273 {offsets = [0, 0], sizes = [8, 32], strides = [1, 1]} : vector<8x128xf32> to vector<8x32xf32>
    %276 = vector.extract_strided_slice %273 {offsets = [0, 32], sizes = [8, 32], strides = [1, 1]} : vector<8x128xf32> to vector<8x32xf32>
    %277 = vector.extract_strided_slice %274 {offsets = [0, 64], sizes = [8, 32], strides = [1, 1]} : vector<8x128xf32> to vector<8x32xf32>
    %278 = vector.extract_strided_slice %273 {offsets = [0, 96], sizes = [8, 32], strides = [1, 1]} : vector<8x128xf32> to vector<8x32xf32>
    %279 = arith.mulf %276, %263 : vector<8x32xf32>
    %280 = arith.mulf %275, %277 : vector<8x32xf32>
    %281 = arith.addf %279, %280 : vector<8x32xf32>
    %282 = math.tanh %281 : vector<8x32xf32>
    %283 = arith.mulf %278, %282 : vector<8x32xf32>
    %284 = arith.index_cast %c9_i32 : i32 to index
    %c0_60 = arith.constant 0 : index
    %c0_61 = arith.constant 0 : index
    %285 = vector.load %arg1[%284, %c0_60, %c0_61] : memref<10x8x32xf32, #tpu.memory_space<vmem>>, vector<1x8x32xf32>
    %286 = vector.shape_cast %285 : vector<1x8x32xf32> to vector<8x32xf32>
    %287 = arith.subf %283, %260 : vector<8x32xf32>
    %288 = arith.mulf %286, %287 : vector<8x32xf32>
    %289 = arith.addf %260, %288 : vector<8x32xf32>
    %290 = arith.subf %281, %263 : vector<8x32xf32>
    %291 = arith.mulf %286, %290 : vector<8x32xf32>
    %292 = arith.addf %263, %291 : vector<8x32xf32>
    %c10_i32 = arith.constant 10 : i32
    %c0_62 = arith.constant 0 : index
    %c0_63 = arith.constant 0 : index
    %293 = vector.load %arg4[%c0_62, %c0_63] : memref<32x32xf32, #tpu.memory_space<vmem>>, vector<32x32xf32>
    %cst_64 = arith.constant dense<0.000000e+00> : vector<8x32xf32>
    %294 = tpu.matmul %289, %293, %cst_64 {dimension_numbers = #tpu.dot_dimension_numbers<[1], [0], [0], [1], [0, 0, 1, 1], [], []>} : vector<8x32xf32>, vector<32x32xf32>, vector<8x32xf32> -> vector<8x32xf32>
    %c0_65 = arith.constant 0 : index
    %c0_66 = arith.constant 0 : index
    %295 = vector.load %arg2[%c0_65, %c0_66] : memref<8x1xf32, #tpu.memory_space<vmem>>, vector<8x1xf32>
    %c0_67 = arith.constant 0 : index
    %c0_68 = arith.constant 0 : index
    %296 = vector.load %arg5[%c0_67, %c0_68] : memref<1x32xf32, #tpu.memory_space<vmem>>, vector<1x32xf32>
    %297 = vector.broadcast %295 : vector<8x1xf32> to vector<8x32xf32>
    %298 = vector.broadcast %296 : vector<1x32xf32> to vector<8x32xf32>
    %299 = arith.mulf %297, %298 : vector<8x32xf32>
    %300 = arith.addf %294, %299 : vector<8x32xf32>
    %c0_69 = arith.constant 0 : index
    %c0_70 = arith.constant 0 : index
    %301 = vector.load %arg6[%c0_69, %c0_70] : memref<1x32xf32, #tpu.memory_space<vmem>>, vector<1x32xf32>
    %302 = vector.broadcast %301 : vector<1x32xf32> to vector<8x32xf32>
    %303 = arith.addf %300, %302 : vector<8x32xf32>
    %cst_71 = arith.constant 0.000000e+00 : f32
    %304 = vector.broadcast %cst_71 : f32 to vector<8x32xf32>
    %305 = arith.maximumf %303, %304 : vector<8x32xf32>
    %c0_72 = arith.constant 0 : index
    %c0_73 = arith.constant 0 : index
    %306 = vector.load %arg7[%c0_72, %c0_73] : memref<32x1xf32, #tpu.memory_space<vmem>>, vector<32x1xf32>
    %cst_74 = arith.constant dense<0.000000e+00> : vector<8x1xf32>
    %307 = tpu.matmul %305, %306, %cst_74 {dimension_numbers = #tpu.dot_dimension_numbers<[1], [0], [0], [1], [0, 0, 1, 1], [], []>} : vector<8x32xf32>, vector<32x1xf32>, vector<8x1xf32> -> vector<8x1xf32>
    %c0_75 = arith.constant 0 : index
    %c0_76 = arith.constant 0 : index
    %308 = vector.load %arg8[%c0_75, %c0_76] : memref<1x1xf32, #tpu.memory_space<vmem>>, vector<1x1xf32>
    %309 = vector.broadcast %308 : vector<1x1xf32> to vector<8x1xf32>
    %310 = arith.addf %307, %309 : vector<8x1xf32>
    %c0_77 = arith.constant 0 : index
    %c0_78 = arith.constant 0 : index
    %311 = vector.load %arg9[%c0_77, %c0_78] : memref<8x1xf32, #tpu.memory_space<vmem>>, vector<8x1xf32>
    tpu.vector_store %arg9[%c0_77, %c0_78], %310 {strides = array<i32>} : memref<8x1xf32, #tpu.memory_space<vmem>>, vector<8x1xf32>,
    return
  }
}

</mosaic_0001>

<llo_original>
// kernel: tpu_custom_call.1
$region0: #{tpu_custom_call.1}
  #allocation0 [shape = 'u32[]', space=smem, size = 0x4, offset = 0x4, fixed_abs, tag = 'smem constant byte address 0x4 - core index']
  #allocation1 [shape = 'u32[144,128]{1,0:T(1,128)}', space=vmem, size = 0x12000, scoped, tag = 'internal scratch']
  #allocation2 [shape = 'f32[1,1]{1,0:T(1,128)S(1)}', space=vmem, size = 0x200, scoped, tag = 'scoped memory for tpu_custom_call.1']
  %s0 = inlined_call_operand.hbm [shape: f32[10,8,128], index: 0, kind: input, shape index: {}]
  %s1 = inlined_call_operand.hbm [shape: f32[10,8,32], index: 1, kind: input, shape index: {}]
  %s2 = inlined_call_operand.vmem [shape: f32[8,1], index: 2, kind: input, shape index: {}]
  %s3 = inlined_call_operand.vmem [shape: f32[32,128], index: 3, kind: input, shape index: {}]
  %s4 = inlined_call_operand.hbm [shape: f32[32,32], index: 4, kind: input, shape index: {}]
  %s5 = inlined_call_operand.vmem [shape: f32[1,32], index: 5, kind: input, shape index: {}]
  %s6 = inlined_call_operand.vmem [shape: f32[1,32], index: 6, kind: input, shape index: {}]
  %s7 = inlined_call_operand.vmem [shape: f32[32,1], index: 7, kind: input, shape index: {}]
  %s8 = inlined_call_operand.<no memory space> [shape: f32[1,1], index: 8, kind: input, shape index: {}]
  %s9 = inlined_call_operand.vmem [shape: f32[8,1], index: 9, kind: output, shape index: {}]
  %s10 = sld [smem:[#allocation0]]
  $region58: #{tpu_custom_call.1} parent=0
    _
  %s12 = ssub.s32 1, %s10
  %s13 = scalar_select 0, %s12, %s10
  %v14 = vstv %s8
  %15 = vst [vmem:[#allocation2] sm:$0x1] %v14
  $region1: #{tpu_custom_call.1} parent=0
    #allocation3 [shape = 'u8[40960]{0}', space=vmem, size = 0xa000, scoped, tag = 'input window, operand 0, single buffered']
    #allocation4 [shape = 's32[1]{0}', space=sflag, size = 0x4, scoped, tag = 'scoped memory for tpu_custom_call.1']
    #allocation5 [shape = 'u8[40960]{0}', space=vmem, size = 0xa000, scoped, tag = 'input window, operand 1, single buffered']
    #allocation6 [shape = 's32[1]{0}', space=sflag, size = 0x4, scoped, tag = 'scoped memory for tpu_custom_call.1']
    #allocation7 [shape = 'u8[16384]{0}', space=vmem, size = 0x4000, scoped, tag = 'input window, operand 4, single buffered']
    %16 = vsyncpa [#allocation4], 0
    %17 = vsyncpa [#allocation6], 0
    // Predicated region
    $region2: #{tpu_custom_call.1} parent=1 // pred_check
      _
    $region3: #{tpu_custom_call.1} parent=1 // pred_check_branch
      %19 = sbr.rel (0) target = $region5
    $region4: #{tpu_custom_call.1} parent=1 // pred_region
      %s21 = ssub.s32 1280, 1280
      %22 = vsyncadd [#allocation4], %s21
      %s23 = sshll.u32 [#allocation3], 4
      %s24 = int_to_ptr.vmem [resolvable:$true] %s23
      %29 = dma.hbm_to_vmem [thread:$0]  %s0, 1280, %s24, [#allocation4], 128, 128, 8
    $region5: #{tpu_custom_call.1} parent=1 // pred_fallthru
      _
    // Predicated region
    $region6: #{tpu_custom_call.1} parent=1 // pred_check
      _
    $region7: #{tpu_custom_call.1} parent=1 // pred_check_branch
      %31 = sbr.rel (0) target = $region9
    $region8: #{tpu_custom_call.1} parent=1 // pred_region
      %s33 = ssub.s32 1280, 1280
      %34 = vsyncadd [#allocation6], %s33
      %s35 = sshll.u32 [#allocation5], 4
      %s36 = int_to_ptr.vmem [resolvable:$true] %s35
      %41 = dma.hbm_to_vmem [thread:$0]  %s1, 1280, %s36, [#allocation6], 128, 128, 8
    $region9: #{tpu_custom_call.1} parent=1 // pred_fallthru
      _
    // Predicated region
    $region10: #{tpu_custom_call.1} parent=1 // pred_check
      _
    $region11: #{tpu_custom_call.1} parent=1 // pred_check_branch
      %43 = sbr.rel (0) target = $region13
    $region12: #{tpu_custom_call.1} parent=1 // pred_region
      _
    $region13: #{tpu_custom_call.1} parent=1 // pred_fallthru
      _
    // Predicated region
    $region14: #{tpu_custom_call.1} parent=1 // pred_check
      _
    $region15: #{tpu_custom_call.1} parent=1 // pred_check_branch
      %45 = sbr.rel (0) target = $region17
    $region16: #{tpu_custom_call.1} parent=1 // pred_region
      _
    $region17: #{tpu_custom_call.1} parent=1 // pred_fallthru
      _
    // Predicated region
    $region18: #{tpu_custom_call.1} parent=1 // pred_check
      _
    $region19: #{tpu_custom_call.1} parent=1 // pred_check_branch
      %47 = sbr.rel (0) target = $region21
    $region20: #{tpu_custom_call.1} parent=1 // pred_region
      %s49 = ssub.s32 512, 512
      %50 = vsyncadd [#allocation6], %s49
      %s51 = sshll.u32 [#allocation7], 4
      %s52 = int_to_ptr.vmem [resolvable:$true] %s51
      %57 = dma.hbm_to_vmem [thread:$0]  %s4, 512, %s52, [#allocation6], 128, 128, 8
    $region21: #{tpu_custom_call.1} parent=1 // pred_fallthru
      _
    // Predicated region
    $region22: #{tpu_custom_call.1} parent=1 // pred_check
      _
    $region23: #{tpu_custom_call.1} parent=1 // pred_check_branch
      %59 = sbr.rel (0) target = $region25
    $region24: #{tpu_custom_call.1} parent=1 // pred_region
      _
    $region25: #{tpu_custom_call.1} parent=1 // pred_fallthru
      _
    // Predicated region
    $region26: #{tpu_custom_call.1} parent=1 // pred_check
      _
    $region27: #{tpu_custom_call.1} parent=1 // pred_check_branch
      %61 = sbr.rel (0) target = $region29
    $region28: #{tpu_custom_call.1} parent=1 // pred_region
      _
    $region29: #{tpu_custom_call.1} parent=1 // pred_fallthru
      _
    // Predicated region
    $region30: #{tpu_custom_call.1} parent=1 // pred_check
      _
    $region31: #{tpu_custom_call.1} parent=1 // pred_check_branch
      %63 = sbr.rel (0) target = $region33
    $region32: #{tpu_custom_call.1} parent=1 // pred_region
      _
    $region33: #{tpu_custom_call.1} parent=1 // pred_fallthru
      _
    // Predicated region
    $region34: #{tpu_custom_call.1} parent=1 // pred_check
      _
    $region35: #{tpu_custom_call.1} parent=1 // pred_check_branch
      %65 = sbr.rel (0) target = $region37
    $region36: #{tpu_custom_call.1} parent=1 // pred_region
      _
    $region37: #{tpu_custom_call.1} parent=1 // pred_fallthru
      _
    // Predicated region
    $region38: #{tpu_custom_call.1} parent=1 // pred_check
      _
    $region39: #{tpu_custom_call.1} parent=1 // pred_check_branch
      %67 = sbr.rel (0) target = $region41
    $region40: #{tpu_custom_call.1} parent=1 // pred_region
      %68 = dma.done [#allocation4], 1280
    $region41: #{tpu_custom_call.1} parent=1 // pred_fallthru
      _
    // Predicated region
    $region42: #{tpu_custom_call.1} parent=1 // pred_check
      _
    $region43: #{tpu_custom_call.1} parent=1 // pred_check_branch
      %70 = sbr.rel (0) target = $region45
    $region44: #{tpu_custom_call.1} parent=1 // pred_region
      %71 = dma.done [#allocation6], 1280
    $region45: #{tpu_custom_call.1} parent=1 // pred_fallthru
      _
    // Predicated region
    $region46: #{tpu_custom_call.1} parent=1 // pred_check
      _
    $region47: #{tpu_custom_call.1} parent=1 // pred_check_branch
      %73 = sbr.rel (0) target = $region49
    $region48: #{tpu_custom_call.1} parent=1 // pred_region
      %74 = dma.done [#allocation6], 512
    $region49: #{tpu_custom_call.1} parent=1 // pred_fallthru
      _
    %v75 = vld [vmem:[%s3] sm:$0xff]
    %v76 = vld [vmem:[%s3 + $0x8] sm:$0xff]
    %v77 = vld [vmem:[%s3 + $0x10] sm:$0xff]
    %v78 = vld [vmem:[%s3 + $0x18] sm:$0xff]
    %v79 = vld [vmem:[#allocation3] sm:$0xff]
    %vm80 = vcmask 261120
    %v82 = vsel %vm80, 0.0, 0
    %84 = vmatprep.subr.mxu0 0.0
    %85 = vmatpush1.msra.mxu0 %v75
    %86 = vmatprep.subr.mxu0 0.0
    %87 = vmatpush1.msra.mxu0 %v76
    %88 = vmatprep.subr.mxu0 0.0
    %89 = vmatpush1.msra.mxu0 %v77
    %90 = vmatprep.subr.mxu0 0.0
    %91 = vmatpush1.msra.mxu0 %v78
    %92 = vmatprep.subr.mxu0 0.0
    %93 = vmatpush1.msra.mxu0 0.0
    %94 = vmatprep.subr.mxu0 0.0
    %95 = vmatpush1.msra.mxu0 0.0
    %96 = vmatprep.subr.mxu0 0.0
    %97 = vmatpush1.msra.mxu0 0.0
    %98 = vmatprep.subr.mxu0 0.0
    %99 = vmatpush1.msra.mxu0 0.0
    %100 = vmatprep.subr.mxu0 0.0
    %101 = vmatpush1.msra.mxu0 0.0
    %102 = vmatprep.subr.mxu0 0.0
    %103 = vmatpush1.msra.mxu0 0.0
    %104 = vmatprep.subr.mxu0 0.0
    %105 = vmatpush1.msra.mxu0 0.0
    %106 = vmatprep.subr.mxu0 0.0
    %107 = vmatpush1.msra.mxu0 0.0
    %108 = vmatprep.subr.mxu0 0.0
    %109 = vmatpush1.msra.mxu0 0.0
    %110 = vmatprep.subr.mxu0 0.0
    %111 = vmatpush1.msra.mxu0 0.0
    %112 = vmatprep.subr.mxu0 0.0
    %113 = vmatpush1.msra.mxu0 0.0
    %114 = vmatprep.subr.mxu0 0.0
    %115 = vmatpush1.msra.mxu0 0.0
    %116 = vmatprep.subr.mxu0 0.0
    %117 = vmatpush1.msra.mxu0 0.0
    %118 = vmatprep.subr.mxu0 0.0
    %119 = vmatpush1.msra.mxu0 0.0
    %120 = vmatprep.subr.mxu0 0.0
    %121 = vmatpush1.msra.mxu0 0.0
    %122 = vmatprep.subr.mxu0 0.0
    %123 = vmatpush1.msra.mxu0 0.0
    %124 = vmatprep.subr.mxu0 0.0
    %125 = vmatpush1.msra.mxu0 0.0
    %126 = vmatprep.subr.mxu0 0.0
    %127 = vmatpush1.msra.mxu0 0.0
    %128 = vmatprep.subr.mxu0 0.0
    %129 = vmatpush1.msra.mxu0 0.0
    %130 = vmatprep.subr.mxu0 0.0
    %131 = vmatpush1.msra.mxu0 0.0
    %132 = vmatprep.subr.mxu0 0.0
    %133 = vmatpush1.msra.mxu0 0.0
    %134 = vmatprep.subr.mxu0 0.0
    %135 = vmatpush1.msra.mxu0 0.0
    %136 = vmatprep.subr.mxu0 0.0
    %137 = vmatpush1.msra.mxu0 0.0
    %138 = vmatprep.subr.mxu0 0.0
    %139 = vmatpush1.msra.mxu0 0.0
    %140 = vmatprep.subr.mxu0 0.0
    %141 = vmatpush1.msra.mxu0 0.0
    %142 = vmatprep.subr.mxu0 0.0
    %143 = vmatpush1.msra.mxu0 0.0
    %144 = vmatprep.subr.mxu0 0.0
    %145 = vmatpush1.msra.mxu0 0.0
    %146 = vmatprep.subr.mxu0 0.0
    %147 = vmatpush1.msra.mxu0 0.0
    %148 = vmatprep.mubr.f32.mxu0 0.0
    %149 = vmatmul.mubr.f32.gmra.mrb[0].mxu0 %v82
    %v150 = vpop.f32.mrb[0].mxu0
    %v151 = vadd.f32 0.0, %v150
    %v152 = vpop.f32.mrb[0].mxu0
    %153 = vdwg.mxu0
    %v154 = vadd.f32 %v79, %v151
    %v155 = vxor.u32 %v154, 2147483648
    %v156 = vmul.f32 %v155, 1.442695
    %v157 = vpow.pop %v156
    %v158 = vadd.f32 %v157, 1.0
    %v159 = vrcp.pop %v158
    %v160 = vmul.f32 1.0, %v159
    %v161 = vtanh.pop %v154
    %v162 = vmul.f32 %v160, 0.0
    %164 = vrot.lane.b32.xlu0 %v161, 64
    %v165 = vpop.permute.xlu0 %164
    %v167 = vmul.f32 %v160, %v165
    %169 = vrot.lane.b32.xlu0 %v167, 32
    %v170 = vpop.permute.xlu0 %169
    %v172 = vadd.f32 %v162, %v170
    %v173 = vtanh.pop %v172
    %175 = vrot.lane.b32.xlu0 %v173, 64
    %v176 = vpop.permute.xlu0 %175
    %v178 = vmul.f32 %v160, %v176
    %v179 = vld [vmem:[#allocation5] sm:$0xff]
    %181 = vrot.lane.b32.xlu0 %v178, 32
    %v182 = vpop.permute.xlu0 %181
    %v184 = vmul.f32 %v179, %v182
    %v185 = vadd.f32 %v184, 0.0
    %187 = vrot.lane.b32.xlu0 %v172, 96
    %v188 = vpop.permute.xlu0 %187
    %v190 = vmul.f32 %v179, %v188
    %v191 = vadd.f32 %v190, 0.0
    %s192 = scalar_lea.vmem [#allocation3], 8
    %v193 = vld [vmem:[%s192] sm:$0xff]
    %v195 = vsel %vm80, %v185, 0
    %197 = vmatprep.subr.mxu0 0.0
    %198 = vmatpush1.msra.mxu0 %v75
    %199 = vmatprep.subr.mxu0 0.0
    %200 = vmatpush1.msra.mxu0 %v76
    %201 = vmatprep.subr.mxu0 0.0
    %202 = vmatpush1.msra.mxu0 %v77
    %203 = vmatprep.subr.mxu0 0.0
    %204 = vmatpush1.msra.mxu0 %v78
    %205 = vmatprep.subr.mxu0 0.0
    %206 = vmatpush1.msra.mxu0 0.0
    %207 = vmatprep.subr.mxu0 0.0
    %208 = vmatpush1.msra.mxu0 0.0
    %209 = vmatprep.subr.mxu0 0.0
    %210 = vmatpush1.msra.mxu0 0.0
    %211 = vmatprep.subr.mxu0 0.0
    %212 = vmatpush1.msra.mxu0 0.0
    %213 = vmatprep.subr.mxu0 0.0
    %214 = vmatpush1.msra.mxu0 0.0
    %215 = vmatprep.subr.mxu0 0.0
    %216 = vmatpush1.msra.mxu0 0.0
    %217 = vmatprep.subr.mxu0 0.0
    %218 = vmatpush1.msra.mxu0 0.0
    %219 = vmatprep.subr.mxu0 0.0
    %220 = vmatpush1.msra.mxu0 0.0
    %221 = vmatprep.subr.mxu0 0.0
    %222 = vmatpush1.msra.mxu0 0.0
    %223 = vmatprep.subr.mxu0 0.0
    %224 = vmatpush1.msra.mxu0 0.0
    %225 = vmatprep.subr.mxu0 0.0
    %226 = vmatpush1.msra.mxu0 0.0
    %227 = vmatprep.subr.mxu0 0.0
    %228 = vmatpush1.msra.mxu0 0.0
    %229 = vmatprep.subr.mxu0 0.0
    %230 = vmatpush1.msra.mxu0 0.0
    %231 = vmatprep.subr.mxu0 0.0
    %232 = vmatpush1.msra.mxu0 0.0
    %233 = vmatprep.subr.mxu0 0.0
    %234 = vmatpush1.msra.mxu0 0.0
    %235 = vmatprep.subr.mxu0 0.0
    %236 = vmatpush1.msra.mxu0 0.0
    %237 = vmatprep.subr.mxu0 0.0
    %238 = vmatpush1.msra.mxu0 0.0
    %239 = vmatprep.subr.mxu0 0.0
    %240 = vmatpush1.msra.mxu0 0.0
    %241 = vmatprep.subr.mxu0 0.0
    %242 = vmatpush1.msra.mxu0 0.0
    %243 = vmatprep.subr.mxu0 0.0
    %244 = vmatpush1.msra.mxu0 0.0
    %245 = vmatprep.subr.mxu0 0.0
    %246 = vmatpush1.msra.mxu0 0.0
    %247 = vmatprep.subr.mxu0 0.0
    %248 = vmatpush1.msra.mxu0 0.0
    %249 = vmatprep.subr.mxu0 0.0
    %250 = vmatpush1.msra.mxu0 0.0
    %251 = vmatprep.subr.mxu0 0.0
    %252 = vmatpush1.msra.mxu0 0.0
    %253 = vmatprep.subr.mxu0 0.0
    %254 = vmatpush1.msra.mxu0 0.0
    %255 = vmatprep.subr.mxu0 0.0
    %256 = vmatpush1.msra.mxu0 0.0
    %257 = vmatprep.subr.mxu0 0.0
    %258 = vmatpush1.msra.mxu0 0.0
    %259 = vmatprep.subr.mxu0 0.0
    %260 = vmatpush1.msra.mxu0 0.0
    %261 = vmatprep.mubr.f32.mxu0 0.0
    %262 = vmatmul.mubr.f32.gmra.mrb[0].mxu0 %v195
    %v263 = vpop.f32.mrb[0].mxu0
    %v264 = vadd.f32 0.0, %v263
    %v265 = vpop.f32.mrb[0].mxu0
    %266 = vdwg.mxu0
    %v267 = vadd.f32 %v193, %v264
    %v268 = vxor.u32 %v267, 2147483648
    %v269 = vmul.f32 %v268, 1.442695
    %v270 = vpow.pop %v269
    %v271 = vadd.f32 %v270, 1.0
    %v272 = vrcp.pop %v271
    %v273 = vmul.f32 1.0, %v272
    %v274 = vtanh.pop %v267
    %276 = vrot.lane.b32.xlu0 %v191, 32
    %v277 = vpop.permute.xlu0 %276
    %v279 = vmul.f32 %v273, %v277
    %281 = vrot.lane.b32.xlu0 %v274, 64
    %v282 = vpop.permute.xlu0 %281
    %v284 = vmul.f32 %v273, %v282
    %286 = vrot.lane.b32.xlu0 %v284, 32
    %v287 = vpop.permute.xlu0 %286
    %v289 = vadd.f32 %v279, %v287
    %v290 = vtanh.pop %v289
    %292 = vrot.lane.b32.xlu0 %v290, 64
    %v293 = vpop.permute.xlu0 %292
    %v295 = vmul.f32 %v273, %v293
    %s296 = scalar_lea.vmem [#allocation5], 8
    %v297 = vld [vmem:[%s296] sm:$0xff]
    %298 = vrot.lane.b32.xlu0 %v185, 96
    %v299 = vpop.permute.xlu0 %298
    %v301 = vsub.f32 %v295, %v299
    %303 = vrot.lane.b32.xlu0 %v301, 32
    %v304 = vpop.permute.xlu0 %303
    %v306 = vmul.f32 %v297, %v304
    %v307 = vadd.f32 %v185, %v306
    %v308 = vsub.f32 %v289, %v277
    %310 = vrot.lane.b32.xlu0 %v308, 96
    %v311 = vpop.permute.xlu0 %310
    %v313 = vmul.f32 %v297, %v311
    %v314 = vadd.f32 %v191, %v313
    %s315 = scalar_lea.vmem [#allocation3], 16
    %v316 = vld [vmem:[%s315] sm:$0xff]
    %v318 = vsel %vm80, %v307, 0
    %320 = vmatprep.subr.mxu0 0.0
    %321 = vmatpush1.msra.mxu0 %v75
    %322 = vmatprep.subr.mxu0 0.0
    %323 = vmatpush1.msra.mxu0 %v76
    %324 = vmatprep.subr.mxu0 0.0
    %325 = vmatpush1.msra.mxu0 %v77
    %326 = vmatprep.subr.mxu0 0.0
    %327 = vmatpush1.msra.mxu0 %v78
    %328 = vmatprep.subr.mxu0 0.0
    %329 = vmatpush1.msra.mxu0 0.0
    %330 = vmatprep.subr.mxu0 0.0
    %331 = vmatpush1.msra.mxu0 0.0
    %332 = vmatprep.subr.mxu0 0.0
    %333 = vmatpush1.msra.mxu0 0.0
    %334 = vmatprep.subr.mxu0 0.0
    %335 = vmatpush1.msra.mxu0 0.0
    %336 = vmatprep.subr.mxu0 0.0
    %337 = vmatpush1.msra.mxu0 0.0
    %338 = vmatprep.subr.mxu0 0.0
    %339 = vmatpush1.msra.mxu0 0.0
    %340 = vmatprep.subr.mxu0 0.0
    %341 = vmatpush1.msra.mxu0 0.0
    %342 = vmatprep.subr.mxu0 0.0
    %343 = vmatpush1.msra.mxu0 0.0
    %344 = vmatprep.subr.mxu0 0.0
    %345 = vmatpush1.msra.mxu0 0.0
    %346 = vmatprep.subr.mxu0 0.0
    %347 = vmatpush1.msra.mxu0 0.0
    %348 = vmatprep.subr.mxu0 0.0
    %349 = vmatpush1.msra.mxu0 0.0
    %350 = vmatprep.subr.mxu0 0.0
    %351 = vmatpush1.msra.mxu0 0.0
    %352 = vmatprep.subr.mxu0 0.0
    %353 = vmatpush1.msra.mxu0 0.0
    %354 = vmatprep.subr.mxu0 0.0
    %355 = vmatpush1.msra.mxu0 0.0
    %356 = vmatprep.subr.mxu0 0.0
    %357 = vmatpush1.msra.mxu0 0.0
    %358 = vmatprep.subr.mxu0 0.0
    %359 = vmatpush1.msra.mxu0 0.0
    %360 = vmatprep.subr.mxu0 0.0
    %361 = vmatpush1.msra.mxu0 0.0
    %362 = vmatprep.subr.mxu0 0.0
    %363 = vmatpush1.msra.mxu0 0.0
    %364 = vmatprep.subr.mxu0 0.0
    %365 = vmatpush1.msra.mxu0 0.0
    %366 = vmatprep.subr.mxu0 0.0
    %367 = vmatpush1.msra.mxu0 0.0
    %368 = vmatprep.subr.mxu0 0.0
    %369 = vmatpush1.msra.mxu0 0.0
    %370 = vmatprep.subr.mxu0 0.0
    %371 = vmatpush1.msra.mxu0 0.0
    %372 = vmatprep.subr.mxu0 0.0
    %373 = vmatpush1.msra.mxu0 0.0
    %374 = vmatprep.subr.mxu0 0.0
    %375 = vmatpush1.msra.mxu0 0.0
    %376 = vmatprep.subr.mxu0 0.0
    %377 = vmatpush1.msra.mxu0 0.0
    %378 = vmatprep.subr.mxu0 0.0
    %379 = vmatpush1.msra.mxu0 0.0
    %380 = vmatprep.subr.mxu0 0.0
    %381 = vmatpush1.msra.mxu0 0.0
    %382 = vmatprep.subr.mxu0 0.0
    %383 = vmatpush1.msra.mxu0 0.0
    %384 = vmatprep.mubr.f32.mxu0 0.0
    %385 = vmatmul.mubr.f32.gmra.mrb[0].mxu0 %v318
    %v386 = vpop.f32.mrb[0].mxu0
    %v387 = vadd.f32 0.0, %v386
    %v388 = vpop.f32.mrb[0].mxu0
    %389 = vdwg.mxu0
    %v390 = vadd.f32 %v316, %v387
    %v391 = vxor.u32 %v390, 2147483648
    %v392 = vmul.f32 %v391, 1.442695
    %v393 = vpow.pop %v392
    %v394 = vadd.f32 %v393, 1.0
    %v395 = vrcp.pop %v394
    %v396 = vmul.f32 1.0, %v395
    %v397 = vtanh.pop %v390
    %399 = vrot.lane.b32.xlu0 %v314, 32
    %v400 = vpop.permute.xlu0 %399
    %v402 = vmul.f32 %v396, %v400
    %404 = vrot.lane.b32.xlu0 %v397, 64
    %v405 = vpop.permute.xlu0 %404
    %v407 = vmul.f32 %v396, %v405
    %409 = vrot.lane.b32.xlu0 %v407, 32
    %v410 = vpop.permute.xlu0 %409
    %v412 = vadd.f32 %v402, %v410
    %v413 = vtanh.pop %v412
    %415 = vrot.lane.b32.xlu0 %v413, 64
    %v416 = vpop.permute.xlu0 %415
    %v418 = vmul.f32 %v396, %v416
    %s419 = scalar_lea.vmem [#allocation5], 16
    %v420 = vld [vmem:[%s419] sm:$0xff]
    %421 = vrot.lane.b32.xlu0 %v307, 96
    %v422 = vpop.permute.xlu0 %421
    %v424 = vsub.f32 %v418, %v422
    %426 = vrot.lane.b32.xlu0 %v424, 32
    %v427 = vpop.permute.xlu0 %426
    %v429 = vmul.f32 %v420, %v427
    %v430 = vadd.f32 %v307, %v429
    %v431 = vsub.f32 %v412, %v400
    %433 = vrot.lane.b32.xlu0 %v431, 96
    %v434 = vpop.permute.xlu0 %433
    %v436 = vmul.f32 %v420, %v434
    %v437 = vadd.f32 %v314, %v436
    %s438 = scalar_lea.vmem [#allocation3], 24
    %v439 = vld [vmem:[%s438] sm:$0xff]
    %v441 = vsel %vm80, %v430, 0
    %443 = vmatprep.subr.mxu0 0.0
    %444 = vmatpush1.msra.mxu0 %v75
    %445 = vmatprep.subr.mxu0 0.0
    %446 = vmatpush1.msra.mxu0 %v76
    %447 = vmatprep.subr.mxu0 0.0
    %448 = vmatpush1.msra.mxu0 %v77
    %449 = vmatprep.subr.mxu0 0.0
    %450 = vmatpush1.msra.mxu0 %v78
    %451 = vmatprep.subr.mxu0 0.0
    %452 = vmatpush1.msra.mxu0 0.0
    %453 = vmatprep.subr.mxu0 0.0
    %454 = vmatpush1.msra.mxu0 0.0
    %455 = vmatprep.subr.mxu0 0.0
    %456 = vmatpush1.msra.mxu0 0.0
    %457 = vmatprep.subr.mxu0 0.0
    %458 = vmatpush1.msra.mxu0 0.0
    %459 = vmatprep.subr.mxu0 0.0
    %460 = vmatpush1.msra.mxu0 0.0
    %461 = vmatprep.subr.mxu0 0.0
    %462 = vmatpush1.msra.mxu0 0.0
    %463 = vmatprep.subr.mxu0 0.0
    %464 = vmatpush1.msra.mxu0 0.0
    %465 = vmatprep.subr.mxu0 0.0
    %466 = vmatpush1.msra.mxu0 0.0
    %467 = vmatprep.subr.mxu0 0.0
    %468 = vmatpush1.msra.mxu0 0.0
    %469 = vmatprep.subr.mxu0 0.0
    %470 = vmatpush1.msra.mxu0 0.0
    %471 = vmatprep.subr.mxu0 0.0
    %472 = vmatpush1.msra.mxu0 0.0
    %473 = vmatprep.subr.mxu0 0.0
    %474 = vmatpush1.msra.mxu0 0.0
    %475 = vmatprep.subr.mxu0 0.0
    %476 = vmatpush1.msra.mxu0 0.0
    %477 = vmatprep.subr.mxu0 0.0
    %478 = vmatpush1.msra.mxu0 0.0
    %479 = vmatprep.subr.mxu0 0.0
    %480 = vmatpush1.msra.mxu0 0.0
    %481 = vmatprep.subr.mxu0 0.0
    %482 = vmatpush1.msra.mxu0 0.0
    %483 = vmatprep.subr.mxu0 0.0
    %484 = vmatpush1.msra.mxu0 0.0
    %485 = vmatprep.subr.mxu0 0.0
    %486 = vmatpush1.msra.mxu0 0.0
    %487 = vmatprep.subr.mxu0 0.0
    %488 = vmatpush1.msra.mxu0 0.0
    %489 = vmatprep.subr.mxu0 0.0
    %490 = vmatpush1.msra.mxu0 0.0
    %491 = vmatprep.subr.mxu0 0.0
    %492 = vmatpush1.msra.mxu0 0.0
    %493 = vmatprep.subr.mxu0 0.0
    %494 = vmatpush1.msra.mxu0 0.0
    %495 = vmatprep.subr.mxu0 0.0
    %496 = vmatpush1.msra.mxu0 0.0
    %497 = vmatprep.subr.mxu0 0.0
    %498 = vmatpush1.msra.mxu0 0.0
    %499 = vmatprep.subr.mxu0 0.0
    %500 = vmatpush1.msra.mxu0 0.0
    %501 = vmatprep.subr.mxu0 0.0
    %502 = vmatpush1.msra.mxu0 0.0
    %503 = vmatprep.subr.mxu0 0.0
    %504 = vmatpush1.msra.mxu0 0.0
    %505 = vmatprep.subr.mxu0 0.0
    %506 = vmatpush1.msra.mxu0 0.0
    %507 = vmatprep.mubr.f32.mxu0 0.0
    %508 = vmatmul.mubr.f32.gmra.mrb[0].mxu0 %v441
    %v509 = vpop.f32.mrb[0].mxu0
    %v510 = vadd.f32 0.0, %v509
    %v511 = vpop.f32.mrb[0].mxu0
    %512 = vdwg.mxu0
    %v513 = vadd.f32 %v439, %v510
    %v514 = vxor.u32 %v513, 2147483648
    %v515 = vmul.f32 %v514, 1.442695
    %v516 = vpow.pop %v515
    %v517 = vadd.f32 %v516, 1.0
    %v518 = vrcp.pop %v517
    %v519 = vmul.f32 1.0, %v518
    %v520 = vtanh.pop %v513
    %522 = vrot.lane.b32.xlu0 %v437, 32
    %v523 = vpop.permute.xlu0 %522
    %v525 = vmul.f32 %v519, %v523
    %527 = vrot.lane.b32.xlu0 %v520, 64
    %v528 = vpop.permute.xlu0 %527
    %v530 = vmul.f32 %v519, %v528
    %532 = vrot.lane.b32.xlu0 %v530, 32
    %v533 = vpop.permute.xlu0 %532
    %v535 = vadd.f32 %v525, %v533
    %v536 = vtanh.pop %v535
    %538 = vrot.lane.b32.xlu0 %v536, 64
    %v539 = vpop.permute.xlu0 %538
    %v541 = vmul.f32 %v519, %v539
    %s542 = scalar_lea.vmem [#allocation5], 24
    %v543 = vld [vmem:[%s542] sm:$0xff]
    %544 = vrot.lane.b32.xlu0 %v430, 96
    %v545 = vpop.permute.xlu0 %544
    %v547 = vsub.f32 %v541, %v545
    %549 = vrot.lane.b32.xlu0 %v547, 32
    %v550 = vpop.permute.xlu0 %549
    %v552 = vmul.f32 %v543, %v550
    %v553 = vadd.f32 %v430, %v552
    %v554 = vsub.f32 %v535, %v523
    %556 = vrot.lane.b32.xlu0 %v554, 96
    %v557 = vpop.permute.xlu0 %556
    %v559 = vmul.f32 %v543, %v557
    %v560 = vadd.f32 %v437, %v559
    %s561 = scalar_lea.vmem [#allocation3], 32
    %v562 = vld [vmem:[%s561] sm:$0xff]
    %v564 = vsel %vm80, %v553, 0
    %566 = vmatprep.subr.mxu0 0.0
    %567 = vmatpush1.msra.mxu0 %v75
    %568 = vmatprep.subr.mxu0 0.0
    %569 = vmatpush1.msra.mxu0 %v76
    %570 = vmatprep.subr.mxu0 0.0
    %571 = vmatpush1.msra.mxu0 %v77
    %572 = vmatprep.subr.mxu0 0.0
    %573 = vmatpush1.msra.mxu0 %v78
    %574 = vmatprep.subr.mxu0 0.0
    %575 = vmatpush1.msra.mxu0 0.0
    %576 = vmatprep.subr.mxu0 0.0
    %577 = vmatpush1.msra.mxu0 0.0
    %578 = vmatprep.subr.mxu0 0.0
    %579 = vmatpush1.msra.mxu0 0.0
    %580 = vmatprep.subr.mxu0 0.0
    %581 = vmatpush1.msra.mxu0 0.0
    %582 = vmatprep.subr.mxu0 0.0
    %583 = vmatpush1.msra.mxu0 0.0
    %584 = vmatprep.subr.mxu0 0.0
    %585 = vmatpush1.msra.mxu0 0.0
    %586 = vmatprep.subr.mxu0 0.0
    %587 = vmatpush1.msra.mxu0 0.0
    %588 = vmatprep.subr.mxu0 0.0
    %589 = vmatpush1.msra.mxu0 0.0
    %590 = vmatprep.subr.mxu0 0.0
    %591 = vmatpush1.msra.mxu0 0.0
    %592 = vmatprep.subr.mxu0 0.0
    %593 = vmatpush1.msra.mxu0 0.0
    %594 = vmatprep.subr.mxu0 0.0
    %595 = vmatpush1.msra.mxu0 0.0
    %596 = vmatprep.subr.mxu0 0.0
    %597 = vmatpush1.msra.mxu0 0.0
    %598 = vmatprep.subr.mxu0 0.0
    %599 = vmatpush1.msra.mxu0 0.0
    %600 = vmatprep.subr.mxu0 0.0
    %601 = vmatpush1.msra.mxu0 0.0
    %602 = vmatprep.subr.mxu0 0.0
    %603 = vmatpush1.msra.mxu0 0.0
    %604 = vmatprep.subr.mxu0 0.0
    %605 = vmatpush1.msra.mxu0 0.0
    %606 = vmatprep.subr.mxu0 0.0
    %607 = vmatpush1.msra.mxu0 0.0
    %608 = vmatprep.subr.mxu0 0.0
    %609 = vmatpush1.msra.mxu0 0.0
    %610 = vmatprep.subr.mxu0 0.0
    %611 = vmatpush1.msra.mxu0 0.0
    %612 = vmatprep.subr.mxu0 0.0
    %613 = vmatpush1.msra.mxu0 0.0
    %614 = vmatprep.subr.mxu0 0.0
    %615 = vmatpush1.msra.mxu0 0.0
    %616 = vmatprep.subr.mxu0 0.0
    %617 = vmatpush1.msra.mxu0 0.0
    %618 = vmatprep.subr.mxu0 0.0
    %619 = vmatpush1.msra.mxu0 0.0
    %620 = vmatprep.subr.mxu0 0.0
    %621 = vmatpush1.msra.mxu0 0.0
    %622 = vmatprep.subr.mxu0 0.0
    %623 = vmatpush1.msra.mxu0 0.0
    %624 = vmatprep.subr.mxu0 0.0
    %625 = vmatpush1.msra.mxu0 0.0
    %626 = vmatprep.subr.mxu0 0.0
    %627 = vmatpush1.msra.mxu0 0.0
    %628 = vmatprep.subr.mxu0 0.0
    %629 = vmatpush1.msra.mxu0 0.0
    %630 = vmatprep.mubr.f32.mxu0 0.0
    %631 = vmatmul.mubr.f32.gmra.mrb[0].mxu0 %v564
    %v632 = vpop.f32.mrb[0].mxu0
    %v633 = vadd.f32 0.0, %v632
    %v634 = vpop.f32.mrb[0].mxu0
    %635 = vdwg.mxu0
    %v636 = vadd.f32 %v562, %v633
    %v637 = vxor.u32 %v636, 2147483648
    %v638 = vmul.f32 %v637, 1.442695
    %v639 = vpow.pop %v638
    %v640 = vadd.f32 %v639, 1.0
    %v641 = vrcp.pop %v640
    %v642 = vmul.f32 1.0, %v641
    %v643 = vtanh.pop %v636
    %645 = vrot.lane.b32.xlu0 %v560, 32
    %v646 = vpop.permute.xlu0 %645
    %v648 = vmul.f32 %v642, %v646
    %650 = vrot.lane.b32.xlu0 %v643, 64
    %v651 = vpop.permute.xlu0 %650
    %v653 = vmul.f32 %v642, %v651
    %655 = vrot.lane.b32.xlu0 %v653, 32
    %v656 = vpop.permute.xlu0 %655
    %v658 = vadd.f32 %v648, %v656
    %v659 = vtanh.pop %v658
    %661 = vrot.lane.b32.xlu0 %v659, 64
    %v662 = vpop.permute.xlu0 %661
    %v664 = vmul.f32 %v642, %v662
    %s665 = scalar_lea.vmem [#allocation5], 32
    %v666 = vld [vmem:[%s665] sm:$0xff]
    %667 = vrot.lane.b32.xlu0 %v553, 96
    %v668 = vpop.permute.xlu0 %667
    %v670 = vsub.f32 %v664, %v668
    %672 = vrot.lane.b32.xlu0 %v670, 32
    %v673 = vpop.permute.xlu0 %672
    %v675 = vmul.f32 %v666, %v673
    %v676 = vadd.f32 %v553, %v675
    %v677 = vsub.f32 %v658, %v646
    %679 = vrot.lane.b32.xlu0 %v677, 96
    %v680 = vpop.permute.xlu0 %679
    %v682 = vmul.f32 %v666, %v680
    %v683 = vadd.f32 %v560, %v682
    %s684 = scalar_lea.vmem [#allocation3], 40
    %v685 = vld [vmem:[%s684] sm:$0xff]
    %v687 = vsel %vm80, %v676, 0
    %689 = vmatprep.subr.mxu0 0.0
    %690 = vmatpush1.msra.mxu0 %v75
    %691 = vmatprep.subr.mxu0 0.0
    %692 = vmatpush1.msra.mxu0 %v76
    %693 = vmatprep.subr.mxu0 0.0
    %694 = vmatpush1.msra.mxu0 %v77
    %695 = vmatprep.subr.mxu0 0.0
    %696 = vmatpush1.msra.mxu0 %v78
    %697 = vmatprep.subr.mxu0 0.0
    %698 = vmatpush1.msra.mxu0 0.0
    %699 = vmatprep.subr.mxu0 0.0
    %700 = vmatpush1.msra.mxu0 0.0
    %701 = vmatprep.subr.mxu0 0.0
    %702 = vmatpush1.msra.mxu0 0.0
    %703 = vmatprep.subr.mxu0 0.0
    %704 = vmatpush1.msra.mxu0 0.0
    %705 = vmatprep.subr.mxu0 0.0
    %706 = vmatpush1.msra.mxu0 0.0
    %707 = vmatprep.subr.mxu0 0.0
    %708 = vmatpush1.msra.mxu0 0.0
    %709 = vmatprep.subr.mxu0 0.0
    %710 = vmatpush1.msra.mxu0 0.0
    %711 = vmatprep.subr.mxu0 0.0
    %712 = vmatpush1.msra.mxu0 0.0
    %713 = vmatprep.subr.mxu0 0.0
    %714 = vmatpush1.msra.mxu0 0.0
    %715 = vmatprep.subr.mxu0 0.0
    %716 = vmatpush1.msra.mxu0 0.0
    %717 = vmatprep.subr.mxu0 0.0
    %718 = vmatpush1.msra.mxu0 0.0
    %719 = vmatprep.subr.mxu0 0.0
    %720 = vmatpush1.msra.mxu0 0.0
    %721 = vmatprep.subr.mxu0 0.0
    %722 = vmatpush1.msra.mxu0 0.0
    %723 = vmatprep.subr.mxu0 0.0
    %724 = vmatpush1.msra.mxu0 0.0
    %725 = vmatprep.subr.mxu0 0.0
    %726 = vmatpush1.msra.mxu0 0.0
    %727 = vmatprep.subr.mxu0 0.0
    %728 = vmatpush1.msra.mxu0 0.0
    %729 = vmatprep.subr.mxu0 0.0
    %730 = vmatpush1.msra.mxu0 0.0
    %731 = vmatprep.subr.mxu0 0.0
    %732 = vmatpush1.msra.mxu0 0.0
    %733 = vmatprep.subr.mxu0 0.0
    %734 = vmatpush1.msra.mxu0 0.0
    %735 = vmatprep.subr.mxu0 0.0
    %736 = vmatpush1.msra.mxu0 0.0
    %737 = vmatprep.subr.mxu0 0.0
    %738 = vmatpush1.msra.mxu0 0.0
    %739 = vmatprep.subr.mxu0 0.0
    %740 = vmatpush1.msra.mxu0 0.0
    %741 = vmatprep.subr.mxu0 0.0
    %742 = vmatpush1.msra.mxu0 0.0
    %743 = vmatprep.subr.mxu0 0.0
    %744 = vmatpush1.msra.mxu0 0.0
    %745 = vmatprep.subr.mxu0 0.0
    %746 = vmatpush1.msra.mxu0 0.0
    %747 = vmatprep.subr.mxu0 0.0
    %748 = vmatpush1.msra.mxu0 0.0
    %749 = vmatprep.subr.mxu0 0.0
    %750 = vmatpush1.msra.mxu0 0.0
    %751 = vmatprep.subr.mxu0 0.0
    %752 = vmatpush1.msra.mxu0 0.0
    %753 = vmatprep.mubr.f32.mxu0 0.0
    %754 = vmatmul.mubr.f32.gmra.mrb[0].mxu0 %v687
    %v755 = vpop.f32.mrb[0].mxu0
    %v756 = vadd.f32 0.0, %v755
    %v757 = vpop.f32.mrb[0].mxu0
    %758 = vdwg.mxu0
    %v759 = vadd.f32 %v685, %v756
    %v760 = vxor.u32 %v759, 2147483648
    %v761 = vmul.f32 %v760, 1.442695
    %v762 = vpow.pop %v761
    %v763 = vadd.f32 %v762, 1.0
    %v764 = vrcp.pop %v763
    %v765 = vmul.f32 1.0, %v764
    %v766 = vtanh.pop %v759
    %768 = vrot.lane.b32.xlu0 %v683, 32
    %v769 = vpop.permute.xlu0 %768
    %v771 = vmul.f32 %v765, %v769
    %773 = vrot.lane.b32.xlu0 %v766, 64
    %v774 = vpop.permute.xlu0 %773
    %v776 = vmul.f32 %v765, %v774
    %778 = vrot.lane.b32.xlu0 %v776, 32
    %v779 = vpop.permute.xlu0 %778
    %v781 = vadd.f32 %v771, %v779
    %v782 = vtanh.pop %v781
    %784 = vrot.lane.b32.xlu0 %v782, 64
    %v785 = vpop.permute.xlu0 %784
    %v787 = vmul.f32 %v765, %v785
    %s788 = scalar_lea.vmem [#allocation5], 40
    %v789 = vld [vmem:[%s788] sm:$0xff]
    %790 = vrot.lane.b32.xlu0 %v676, 96
    %v791 = vpop.permute.xlu0 %790
    %v793 = vsub.f32 %v787, %v791
    %795 = vrot.lane.b32.xlu0 %v793, 32
    %v796 = vpop.permute.xlu0 %795
    %v798 = vmul.f32 %v789, %v796
    %v799 = vadd.f32 %v676, %v798
    %v800 = vsub.f32 %v781, %v769
    %802 = vrot.lane.b32.xlu0 %v800, 96
    %v803 = vpop.permute.xlu0 %802
    %v805 = vmul.f32 %v789, %v803
    %v806 = vadd.f32 %v683, %v805
    %s807 = scalar_lea.vmem [#allocation3], 48
    %v808 = vld [vmem:[%s807] sm:$0xff]
    %v810 = vsel %vm80, %v799, 0
    %812 = vmatprep.subr.mxu0 0.0
    %813 = vmatpush1.msra.mxu0 %v75
    %814 = vmatprep.subr.mxu0 0.0
    %815 = vmatpush1.msra.mxu0 %v76
    %816 = vmatprep.subr.mxu0 0.0
    %817 = vmatpush1.msra.mxu0 %v77
    %818 = vmatprep.subr.mxu0 0.0
    %819 = vmatpush1.msra.mxu0 %v78
    %820 = vmatprep.subr.mxu0 0.0
    %821 = vmatpush1.msra.mxu0 0.0
    %822 = vmatprep.subr.mxu0 0.0
    %823 = vmatpush1.msra.mxu0 0.0
    %824 = vmatprep.subr.mxu0 0.0
    %825 = vmatpush1.msra.mxu0 0.0
    %826 = vmatprep.subr.mxu0 0.0
    %827 = vmatpush1.msra.mxu0 0.0
    %828 = vmatprep.subr.mxu0 0.0
    %829 = vmatpush1.msra.mxu0 0.0
    %830 = vmatprep.subr.mxu0 0.0
    %831 = vmatpush1.msra.mxu0 0.0
    %832 = vmatprep.subr.mxu0 0.0
    %833 = vmatpush1.msra.mxu0 0.0
    %834 = vmatprep.subr.mxu0 0.0
    %835 = vmatpush1.msra.mxu0 0.0
    %836 = vmatprep.subr.mxu0 0.0
    %837 = vmatpush1.msra.mxu0 0.0
    %838 = vmatprep.subr.mxu0 0.0
    %839 = vmatpush1.msra.mxu0 0.0
    %840 = vmatprep.subr.mxu0 0.0
    %841 = vmatpush1.msra.mxu0 0.0
    %842 = vmatprep.subr.mxu0 0.0
    %843 = vmatpush1.msra.mxu0 0.0
    %844 = vmatprep.subr.mxu0 0.0
    %845 = vmatpush1.msra.mxu0 0.0
    %846 = vmatprep.subr.mxu0 0.0
    %847 = vmatpush1.msra.mxu0 0.0
    %848 = vmatprep.subr.mxu0 0.0
    %849 = vmatpush1.msra.mxu0 0.0
    %850 = vmatprep.subr.mxu0 0.0
    %851 = vmatpush1.msra.mxu0 0.0
    %852 = vmatprep.subr.mxu0 0.0
    %853 = vmatpush1.msra.mxu0 0.0
    %854 = vmatprep.subr.mxu0 0.0
    %855 = vmatpush1.msra.mxu0 0.0
    %856 = vmatprep.subr.mxu0 0.0
    %857 = vmatpush1.msra.mxu0 0.0
    %858 = vmatprep.subr.mxu0 0.0
    %859 = vmatpush1.msra.mxu0 0.0
    %860 = vmatprep.subr.mxu0 0.0
    %861 = vmatpush1.msra.mxu0 0.0
    %862 = vmatprep.subr.mxu0 0.0
    %863 = vmatpush1.msra.mxu0 0.0
    %864 = vmatprep.subr.mxu0 0.0
    %865 = vmatpush1.msra.mxu0 0.0
    %866 = vmatprep.subr.mxu0 0.0
    %867 = vmatpush1.msra.mxu0 0.0
    %868 = vmatprep.subr.mxu0 0.0
    %869 = vmatpush1.msra.mxu0 0.0
    %870 = vmatprep.subr.mxu0 0.0
    %871 = vmatpush1.msra.mxu0 0.0
    %872 = vmatprep.subr.mxu0 0.0
    %873 = vmatpush1.msra.mxu0 0.0
    %874 = vmatprep.subr.mxu0 0.0
    %875 = vmatpush1.msra.mxu0 0.0
    %876 = vmatprep.mubr.f32.mxu0 0.0
    %877 = vmatmul.mubr.f32.gmra.mrb[0].mxu0 %v810
    %v878 = vpop.f32.mrb[0].mxu0
    %v879 = vadd.f32 0.0, %v878
    %v880 = vpop.f32.mrb[0].mxu0
    %881 = vdwg.mxu0
    %v882 = vadd.f32 %v808, %v879
    %v883 = vxor.u32 %v882, 2147483648
    %v884 = vmul.f32 %v883, 1.442695
    %v885 = vpow.pop %v884
    %v886 = vadd.f32 %v885, 1.0
    %v887 = vrcp.pop %v886
    %v888 = vmul.f32 1.0, %v887
    %v889 = vtanh.pop %v882
    %891 = vrot.lane.b32.xlu0 %v806, 32
    %v892 = vpop.permute.xlu0 %891
    %v894 = vmul.f32 %v888, %v892
    %896 = vrot.lane.b32.xlu0 %v889, 64
    %v897 = vpop.permute.xlu0 %896
    %v899 = vmul.f32 %v888, %v897
    %901 = vrot.lane.b32.xlu0 %v899, 32
    %v902 = vpop.permute.xlu0 %901
    %v904 = vadd.f32 %v894, %v902
    %v905 = vtanh.pop %v904
    %907 = vrot.lane.b32.xlu0 %v905, 64
    %v908 = vpop.permute.xlu0 %907
    %v910 = vmul.f32 %v888, %v908
    %s911 = scalar_lea.vmem [#allocation5], 48
    %v912 = vld [vmem:[%s911] sm:$0xff]
    %913 = vrot.lane.b32.xlu0 %v799, 96
    %v914 = vpop.permute.xlu0 %913
    %v916 = vsub.f32 %v910, %v914
    %918 = vrot.lane.b32.xlu0 %v916, 32
    %v919 = vpop.permute.xlu0 %918
    %v921 = vmul.f32 %v912, %v919
    %v922 = vadd.f32 %v799, %v921
    %v923 = vsub.f32 %v904, %v892
    %925 = vrot.lane.b32.xlu0 %v923, 96
    %v926 = vpop.permute.xlu0 %925
    %v928 = vmul.f32 %v912, %v926
    %v929 = vadd.f32 %v806, %v928
    %s930 = scalar_lea.vmem [#allocation3], 56
    %v931 = vld [vmem:[%s930] sm:$0xff]
    %v933 = vsel %vm80, %v922, 0
    %935 = vmatprep.subr.mxu0 0.0
    %936 = vmatpush1.msra.mxu0 %v75
    %937 = vmatprep.subr.mxu0 0.0
    %938 = vmatpush1.msra.mxu0 %v76
    %939 = vmatprep.subr.mxu0 0.0
    %940 = vmatpush1.msra.mxu0 %v77
    %941 = vmatprep.subr.mxu0 0.0
    %942 = vmatpush1.msra.mxu0 %v78
    %943 = vmatprep.subr.mxu0 0.0
    %944 = vmatpush1.msra.mxu0 0.0
    %945 = vmatprep.subr.mxu0 0.0
    %946 = vmatpush1.msra.mxu0 0.0
    %947 = vmatprep.subr.mxu0 0.0
    %948 = vmatpush1.msra.mxu0 0.0
    %949 = vmatprep.subr.mxu0 0.0
    %950 = vmatpush1.msra.mxu0 0.0
    %951 = vmatprep.subr.mxu0 0.0
    %952 = vmatpush1.msra.mxu0 0.0
    %953 = vmatprep.subr.mxu0 0.0
    %954 = vmatpush1.msra.mxu0 0.0
    %955 = vmatprep.subr.mxu0 0.0
    %956 = vmatpush1.msra.mxu0 0.0
    %957 = vmatprep.subr.mxu0 0.0
    %958 = vmatpush1.msra.mxu0 0.0
    %959 = vmatprep.subr.mxu0 0.0
    %960 = vmatpush1.msra.mxu0 0.0
    %961 = vmatprep.subr.mxu0 0.0
    %962 = vmatpush1.msra.mxu0 0.0
    %963 = vmatprep.subr.mxu0 0.0
    %964 = vmatpush1.msra.mxu0 0.0
    %965 = vmatprep.subr.mxu0 0.0
    %966 = vmatpush1.msra.mxu0 0.0
    %967 = vmatprep.subr.mxu0 0.0
    %968 = vmatpush1.msra.mxu0 0.0
    %969 = vmatprep.subr.mxu0 0.0
    %970 = vmatpush1.msra.mxu0 0.0
    %971 = vmatprep.subr.mxu0 0.0
    %972 = vmatpush1.msra.mxu0 0.0
    %973 = vmatprep.subr.mxu0 0.0
    %974 = vmatpush1.msra.mxu0 0.0
    %975 = vmatprep.subr.mxu0 0.0
    %976 = vmatpush1.msra.mxu0 0.0
    %977 = vmatprep.subr.mxu0 0.0
    %978 = vmatpush1.msra.mxu0 0.0
    %979 = vmatprep.subr.mxu0 0.0
    %980 = vmatpush1.msra.mxu0 0.0
    %981 = vmatprep.subr.mxu0 0.0
    %982 = vmatpush1.msra.mxu0 0.0
    %983 = vmatprep.subr.mxu0 0.0
    %984 = vmatpush1.msra.mxu0 0.0
    %985 = vmatprep.subr.mxu0 0.0
    %986 = vmatpush1.msra.mxu0 0.0
    %987 = vmatprep.subr.mxu0 0.0
    %988 = vmatpush1.msra.mxu0 0.0
    %989 = vmatprep.subr.mxu0 0.0
    %990 = vmatpush1.msra.mxu0 0.0
    %991 = vmatprep.subr.mxu0 0.0
    %992 = vmatpush1.msra.mxu0 0.0
    %993 = vmatprep.subr.mxu0 0.0
    %994 = vmatpush1.msra.mxu0 0.0
    %995 = vmatprep.subr.mxu0 0.0
    %996 = vmatpush1.msra.mxu0 0.0
    %997 = vmatprep.subr.mxu0 0.0
    %998 = vmatpush1.msra.mxu0 0.0
    %999 = vmatprep.mubr.f32.mxu0 0.0
    %1000 = vmatmul.mubr.f32.gmra.mrb[0].mxu0 %v933
    %v1001 = vpop.f32.mrb[0].mxu0
    %v1002 = vadd.f32 0.0, %v1001
    %v1003 = vpop.f32.mrb[0].mxu0
    %1004 = vdwg.mxu0
    %v1005 = vadd.f32 %v931, %v1002
    %v1006 = vxor.u32 %v1005, 2147483648
    %v1007 = vmul.f32 %v1006, 1.442695
    %v1008 = vpow.pop %v1007
    %v1009 = vadd.f32 %v1008, 1.0
    %v1010 = vrcp.pop %v1009
    %v1011 = vmul.f32 1.0, %v1010
    %v1012 = vtanh.pop %v1005
    %1014 = vrot.lane.b32.xlu0 %v929, 32
    %v1015 = vpop.permute.xlu0 %1014
    %v1017 = vmul.f32 %v1011, %v1015
    %1019 = vrot.lane.b32.xlu0 %v1012, 64
    %v1020 = vpop.permute.xlu0 %1019
    %v1022 = vmul.f32 %v1011, %v1020
    %1024 = vrot.lane.b32.xlu0 %v1022, 32
    %v1025 = vpop.permute.xlu0 %1024
    %v1027 = vadd.f32 %v1017, %v1025
    %v1028 = vtanh.pop %v1027
    %1030 = vrot.lane.b32.xlu0 %v1028, 64
    %v1031 = vpop.permute.xlu0 %1030
    %v1033 = vmul.f32 %v1011, %v1031
    %s1034 = scalar_lea.vmem [#allocation5], 56
    %v1035 = vld [vmem:[%s1034] sm:$0xff]
    %1036 = vrot.lane.b32.xlu0 %v922, 96
    %v1037 = vpop.permute.xlu0 %1036
    %v1039 = vsub.f32 %v1033, %v1037
    %1041 = vrot.lane.b32.xlu0 %v1039, 32
    %v1042 = vpop.permute.xlu0 %1041
    %v1044 = vmul.f32 %v1035, %v1042
    %v1045 = vadd.f32 %v922, %v1044
    %v1046 = vsub.f32 %v1027, %v1015
    %1048 = vrot.lane.b32.xlu0 %v1046, 96
    %v1049 = vpop.permute.xlu0 %1048
    %v1051 = vmul.f32 %v1035, %v1049
    %v1052 = vadd.f32 %v929, %v1051
    %s1053 = scalar_lea.vmem [#allocation3], 64
    %v1054 = vld [vmem:[%s1053] sm:$0xff]
    %v1056 = vsel %vm80, %v1045, 0
    %1058 = vmatprep.subr.mxu0 0.0
    %1059 = vmatpush1.msra.mxu0 %v75
    %1060 = vmatprep.subr.mxu0 0.0
    %1061 = vmatpush1.msra.mxu0 %v76
    %1062 = vmatprep.subr.mxu0 0.0
    %1063 = vmatpush1.msra.mxu0 %v77
    %1064 = vmatprep.subr.mxu0 0.0
    %1065 = vmatpush1.msra.mxu0 %v78
    %1066 = vmatprep.subr.mxu0 0.0
    %1067 = vmatpush1.msra.mxu0 0.0
    %1068 = vmatprep.subr.mxu0 0.0
    %1069 = vmatpush1.msra.mxu0 0.0
    %1070 = vmatprep.subr.mxu0 0.0
    %1071 = vmatpush1.msra.mxu0 0.0
    %1072 = vmatprep.subr.mxu0 0.0
    %1073 = vmatpush1.msra.mxu0 0.0
    %1074 = vmatprep.subr.mxu0 0.0
    %1075 = vmatpush1.msra.mxu0 0.0
    %1076 = vmatprep.subr.mxu0 0.0
    %1077 = vmatpush1.msra.mxu0 0.0
    %1078 = vmatprep.subr.mxu0 0.0
    %1079 = vmatpush1.msra.mxu0 0.0
    %1080 = vmatprep.subr.mxu0 0.0
    %1081 = vmatpush1.msra.mxu0 0.0
    %1082 = vmatprep.subr.mxu0 0.0
    %1083 = vmatpush1.msra.mxu0 0.0
    %1084 = vmatprep.subr.mxu0 0.0
    %1085 = vmatpush1.msra.mxu0 0.0
    %1086 = vmatprep.subr.mxu0 0.0
    %1087 = vmatpush1.msra.mxu0 0.0
    %1088 = vmatprep.subr.mxu0 0.0
    %1089 = vmatpush1.msra.mxu0 0.0
    %1090 = vmatprep.subr.mxu0 0.0
    %1091 = vmatpush1.msra.mxu0 0.0
    %1092 = vmatprep.subr.mxu0 0.0
    %1093 = vmatpush1.msra.mxu0 0.0
    %1094 = vmatprep.subr.mxu0 0.0
    %1095 = vmatpush1.msra.mxu0 0.0
    %1096 = vmatprep.subr.mxu0 0.0
    %1097 = vmatpush1.msra.mxu0 0.0
    %1098 = vmatprep.subr.mxu0 0.0
    %1099 = vmatpush1.msra.mxu0 0.0
    %1100 = vmatprep.subr.mxu0 0.0
    %1101 = vmatpush1.msra.mxu0 0.0
    %1102 = vmatprep.subr.mxu0 0.0
    %1103 = vmatpush1.msra.mxu0 0.0
    %1104 = vmatprep.subr.mxu0 0.0
    %1105 = vmatpush1.msra.mxu0 0.0
    %1106 = vmatprep.subr.mxu0 0.0
    %1107 = vmatpush1.msra.mxu0 0.0
    %1108 = vmatprep.subr.mxu0 0.0
    %1109 = vmatpush1.msra.mxu0 0.0
    %1110 = vmatprep.subr.mxu0 0.0
    %1111 = vmatpush1.msra.mxu0 0.0
    %1112 = vmatprep.subr.mxu0 0.0
    %1113 = vmatpush1.msra.mxu0 0.0
    %1114 = vmatprep.subr.mxu0 0.0
    %1115 = vmatpush1.msra.mxu0 0.0
    %1116 = vmatprep.subr.mxu0 0.0
    %1117 = vmatpush1.msra.mxu0 0.0
    %1118 = vmatprep.subr.mxu0 0.0
    %1119 = vmatpush1.msra.mxu0 0.0
    %1120 = vmatprep.subr.mxu0 0.0
    %1121 = vmatpush1.msra.mxu0 0.0
    %1122 = vmatprep.mubr.f32.mxu0 0.0
    %1123 = vmatmul.mubr.f32.gmra.mrb[0].mxu0 %v1056
    %v1124 = vpop.f32.mrb[0].mxu0
    %v1125 = vadd.f32 0.0, %v1124
    %v1126 = vpop.f32.mrb[0].mxu0
    %1127 = vdwg.mxu0
    %v1128 = vadd.f32 %v1054, %v1125
    %v1129 = vxor.u32 %v1128, 2147483648
    %v1130 = vmul.f32 %v1129, 1.442695
    %v1131 = vpow.pop %v1130
    %v1132 = vadd.f32 %v1131, 1.0
    %v1133 = vrcp.pop %v1132
    %v1134 = vmul.f32 1.0, %v1133
    %v1135 = vtanh.pop %v1128
    %1137 = vrot.lane.b32.xlu0 %v1052, 32
    %v1138 = vpop.permute.xlu0 %1137
    %v1140 = vmul.f32 %v1134, %v1138
    %1142 = vrot.lane.b32.xlu0 %v1135, 64
    %v1143 = vpop.permute.xlu0 %1142
    %v1145 = vmul.f32 %v1134, %v1143
    %1147 = vrot.lane.b32.xlu0 %v1145, 32
    %v1148 = vpop.permute.xlu0 %1147
    %v1150 = vadd.f32 %v1140, %v1148
    %v1151 = vtanh.pop %v1150
    %1153 = vrot.lane.b32.xlu0 %v1151, 64
    %v1154 = vpop.permute.xlu0 %1153
    %v1156 = vmul.f32 %v1134, %v1154
    %s1157 = scalar_lea.vmem [#allocation5], 64
    %v1158 = vld [vmem:[%s1157] sm:$0xff]
    %1159 = vrot.lane.b32.xlu0 %v1045, 96
    %v1160 = vpop.permute.xlu0 %1159
    %v1162 = vsub.f32 %v1156, %v1160
    %1164 = vrot.lane.b32.xlu0 %v1162, 32
    %v1165 = vpop.permute.xlu0 %1164
    %v1167 = vmul.f32 %v1158, %v1165
    %v1168 = vadd.f32 %v1045, %v1167
    %v1169 = vsub.f32 %v1150, %v1138
    %1171 = vrot.lane.b32.xlu0 %v1169, 96
    %v1172 = vpop.permute.xlu0 %1171
    %v1174 = vmul.f32 %v1158, %v1172
    %v1175 = vadd.f32 %v1052, %v1174
    %s1176 = scalar_lea.vmem [#allocation3], 72
    %v1177 = vld [vmem:[%s1176] sm:$0xff]
    %v1179 = vsel %vm80, %v1168, 0
    %1181 = vmatprep.subr.mxu0 0.0
    %1182 = vmatpush1.msra.mxu0 %v75
    %1183 = vmatprep.subr.mxu0 0.0
    %1184 = vmatpush1.msra.mxu0 %v76
    %1185 = vmatprep.subr.mxu0 0.0
    %1186 = vmatpush1.msra.mxu0 %v77
    %1187 = vmatprep.subr.mxu0 0.0
    %1188 = vmatpush1.msra.mxu0 %v78
    %1189 = vmatprep.subr.mxu0 0.0
    %1190 = vmatpush1.msra.mxu0 0.0
    %1191 = vmatprep.subr.mxu0 0.0
    %1192 = vmatpush1.msra.mxu0 0.0
    %1193 = vmatprep.subr.mxu0 0.0
    %1194 = vmatpush1.msra.mxu0 0.0
    %1195 = vmatprep.subr.mxu0 0.0
    %1196 = vmatpush1.msra.mxu0 0.0
    %1197 = vmatprep.subr.mxu0 0.0
    %1198 = vmatpush1.msra.mxu0 0.0
    %1199 = vmatprep.subr.mxu0 0.0
    %1200 = vmatpush1.msra.mxu0 0.0
    %1201 = vmatprep.subr.mxu0 0.0
    %1202 = vmatpush1.msra.mxu0 0.0
    %1203 = vmatprep.subr.mxu0 0.0
    %1204 = vmatpush1.msra.mxu0 0.0
    %1205 = vmatprep.subr.mxu0 0.0
    %1206 = vmatpush1.msra.mxu0 0.0
    %1207 = vmatprep.subr.mxu0 0.0
    %1208 = vmatpush1.msra.mxu0 0.0
    %1209 = vmatprep.subr.mxu0 0.0
    %1210 = vmatpush1.msra.mxu0 0.0
    %1211 = vmatprep.subr.mxu0 0.0
    %1212 = vmatpush1.msra.mxu0 0.0
    %1213 = vmatprep.subr.mxu0 0.0
    %1214 = vmatpush1.msra.mxu0 0.0
    %1215 = vmatprep.subr.mxu0 0.0
    %1216 = vmatpush1.msra.mxu0 0.0
    %1217 = vmatprep.subr.mxu0 0.0
    %1218 = vmatpush1.msra.mxu0 0.0
    %1219 = vmatprep.subr.mxu0 0.0
    %1220 = vmatpush1.msra.mxu0 0.0
    %1221 = vmatprep.subr.mxu0 0.0
    %1222 = vmatpush1.msra.mxu0 0.0
    %1223 = vmatprep.subr.mxu0 0.0
    %1224 = vmatpush1.msra.mxu0 0.0
    %1225 = vmatprep.subr.mxu0 0.0
    %1226 = vmatpush1.msra.mxu0 0.0
    %1227 = vmatprep.subr.mxu0 0.0
    %1228 = vmatpush1.msra.mxu0 0.0
    %1229 = vmatprep.subr.mxu0 0.0
    %1230 = vmatpush1.msra.mxu0 0.0
    %1231 = vmatprep.subr.mxu0 0.0
    %1232 = vmatpush1.msra.mxu0 0.0
    %1233 = vmatprep.subr.mxu0 0.0
    %1234 = vmatpush1.msra.mxu0 0.0
    %1235 = vmatprep.subr.mxu0 0.0
    %1236 = vmatpush1.msra.mxu0 0.0
    %1237 = vmatprep.subr.mxu0 0.0
    %1238 = vmatpush1.msra.mxu0 0.0
    %1239 = vmatprep.subr.mxu0 0.0
    %1240 = vmatpush1.msra.mxu0 0.0
    %1241 = vmatprep.subr.mxu0 0.0
    %1242 = vmatpush1.msra.mxu0 0.0
    %1243 = vmatprep.subr.mxu0 0.0
    %1244 = vmatpush1.msra.mxu0 0.0
    %1245 = vmatprep.mubr.f32.mxu0 0.0
    %1246 = vmatmul.mubr.f32.gmra.mrb[0].mxu0 %v1179
    %v1247 = vpop.f32.mrb[0].mxu0
    %v1248 = vadd.f32 0.0, %v1247
    %v1249 = vpop.f32.mrb[0].mxu0
    %1250 = vdwg.mxu0
    %v1251 = vadd.f32 %v1177, %v1248
    %v1252 = vxor.u32 %v1251, 2147483648
    %v1253 = vmul.f32 %v1252, 1.442695
    %v1254 = vpow.pop %v1253
    %v1255 = vadd.f32 %v1254, 1.0
    %v1256 = vrcp.pop %v1255
    %v1257 = vmul.f32 1.0, %v1256
    %v1258 = vtanh.pop %v1251
    %1260 = vrot.lane.b32.xlu0 %v1175, 32
    %v1261 = vpop.permute.xlu0 %1260
    %v1263 = vmul.f32 %v1257, %v1261
    %1265 = vrot.lane.b32.xlu0 %v1258, 64
    %v1266 = vpop.permute.xlu0 %1265
    %v1268 = vmul.f32 %v1257, %v1266
    %1270 = vrot.lane.b32.xlu0 %v1268, 32
    %v1271 = vpop.permute.xlu0 %1270
    %v1273 = vadd.f32 %v1263, %v1271
    %v1274 = vtanh.pop %v1273
    %1276 = vrot.lane.b32.xlu0 %v1274, 64
    %v1277 = vpop.permute.xlu0 %1276
    %v1279 = vmul.f32 %v1257, %v1277
    %s1280 = scalar_lea.vmem [#allocation5], 72
    %v1281 = vld [vmem:[%s1280] sm:$0xff]
    %1282 = vrot.lane.b32.xlu0 %v1168, 96
    %v1283 = vpop.permute.xlu0 %1282
    %v1285 = vsub.f32 %v1279, %v1283
    %1287 = vrot.lane.b32.xlu0 %v1285, 32
    %v1288 = vpop.permute.xlu0 %1287
    %v1290 = vmul.f32 %v1281, %v1288
    %v1291 = vadd.f32 %v1168, %v1290
    %v1292 = vld [vmem:[#allocation7] sm:$0xff]
    %v1293 = vld [vmem:[#allocation7 + $0x8] sm:$0xff]
    %v1294 = vld [vmem:[#allocation7 + $0x10] sm:$0xff]
    %v1295 = vld [vmem:[#allocation7 + $0x18] sm:$0xff]
    %v1296 = vld [vmem:[%s2] sm:$0xff]
    %v1297 = vld [vmem:[%s5] sm:$0x1]
    %1299 = vset.pattern.permute.xlu0 0
    %1300 = vperm.xlu0 %1299, %v1296
    %v1301 = vpop.permute.xlu0 %1300
    %v1304 = vlaneseq
    %v1305 = vshrl.u32 %v1304, 7
    %v1306 = vsub.s32 0, %v1305
    %v1307 = vrot.slane %v1297, %v1306
    %v1309 = vmul.f32 %v1301, %v1307
    %v1311 = vsel %vm80, %v1291, 0
    %1313 = vmatprep.subr.mxu0 0.0
    %1314 = vmatpush1.msra.mxu0 %v1292
    %1315 = vmatprep.subr.mxu0 0.0
    %1316 = vmatpush1.msra.mxu0 %v1293
    %1317 = vmatprep.subr.mxu0 0.0
    %1318 = vmatpush1.msra.mxu0 %v1294
    %1319 = vmatprep.subr.mxu0 0.0
    %1320 = vmatpush1.msra.mxu0 %v1295
    %1321 = vmatprep.subr.mxu0 0.0
    %1322 = vmatpush1.msra.mxu0 0.0
    %1323 = vmatprep.subr.mxu0 0.0
    %1324 = vmatpush1.msra.mxu0 0.0
    %1325 = vmatprep.subr.mxu0 0.0
    %1326 = vmatpush1.msra.mxu0 0.0
    %1327 = vmatprep.subr.mxu0 0.0
    %1328 = vmatpush1.msra.mxu0 0.0
    %1329 = vmatprep.subr.mxu0 0.0
    %1330 = vmatpush1.msra.mxu0 0.0
    %1331 = vmatprep.subr.mxu0 0.0
    %1332 = vmatpush1.msra.mxu0 0.0
    %1333 = vmatprep.subr.mxu0 0.0
    %1334 = vmatpush1.msra.mxu0 0.0
    %1335 = vmatprep.subr.mxu0 0.0
    %1336 = vmatpush1.msra.mxu0 0.0
    %1337 = vmatprep.subr.mxu0 0.0
    %1338 = vmatpush1.msra.mxu0 0.0
    %1339 = vmatprep.subr.mxu0 0.0
    %1340 = vmatpush1.msra.mxu0 0.0
    %1341 = vmatprep.subr.mxu0 0.0
    %1342 = vmatpush1.msra.mxu0 0.0
    %1343 = vmatprep.subr.mxu0 0.0
    %1344 = vmatpush1.msra.mxu0 0.0
    %1345 = vmatprep.subr.mxu0 0.0
    %1346 = vmatpush1.msra.mxu0 0.0
    %1347 = vmatprep.subr.mxu0 0.0
    %1348 = vmatpush1.msra.mxu0 0.0
    %1349 = vmatprep.subr.mxu0 0.0
    %1350 = vmatpush1.msra.mxu0 0.0
    %1351 = vmatprep.subr.mxu0 0.0
    %1352 = vmatpush1.msra.mxu0 0.0
    %1353 = vmatprep.subr.mxu0 0.0
    %1354 = vmatpush1.msra.mxu0 0.0
    %1355 = vmatprep.subr.mxu0 0.0
    %1356 = vmatpush1.msra.mxu0 0.0
    %1357 = vmatprep.subr.mxu0 0.0
    %1358 = vmatpush1.msra.mxu0 0.0
    %1359 = vmatprep.subr.mxu0 0.0
    %1360 = vmatpush1.msra.mxu0 0.0
    %1361 = vmatprep.subr.mxu0 0.0
    %1362 = vmatpush1.msra.mxu0 0.0
    %1363 = vmatprep.subr.mxu0 0.0
    %1364 = vmatpush1.msra.mxu0 0.0
    %1365 = vmatprep.subr.mxu0 0.0
    %1366 = vmatpush1.msra.mxu0 0.0
    %1367 = vmatprep.subr.mxu0 0.0
    %1368 = vmatpush1.msra.mxu0 0.0
    %1369 = vmatprep.subr.mxu0 0.0
    %1370 = vmatpush1.msra.mxu0 0.0
    %1371 = vmatprep.subr.mxu0 0.0
    %1372 = vmatpush1.msra.mxu0 0.0
    %1373 = vmatprep.subr.mxu0 0.0
    %1374 = vmatpush1.msra.mxu0 0.0
    %1375 = vmatprep.subr.mxu0 0.0
    %1376 = vmatpush1.msra.mxu0 0.0
    %1377 = vmatprep.mubr.f32.mxu0 0.0
    %1378 = vmatmul.mubr.f32.gmra.mrb[0].mxu0 %v1311
    %v1379 = vpop.f32.mrb[0].mxu0
    %v1380 = vadd.f32 %v1309, %v1379
    %v1381 = vpop.f32.mrb[0].mxu0
    %1382 = vdwg.mxu0
    %v1383 = vld [vmem:[%s6] sm:$0x1]
    %v1385 = vlaneseq
    %v1386 = vshrl.u32 %v1385, 7
    %v1387 = vsub.s32 0, %v1386
    %v1388 = vrot.slane %v1383, %v1387
    %v1390 = vadd.f32 %v1380, %v1388
    %v1391 = vmax.f32 %v1390, 0.0
    %v1392 = vld [vmem:[%s7] sm:$0xff]
    %v1393 = vld [vmem:[%s7 + $0x8] sm:$0xff]
    %v1394 = vld [vmem:[%s7 + $0x10] sm:$0xff]
    %v1395 = vld [vmem:[%s7 + $0x18] sm:$0xff]
    %v1396 = vld [vmem:[#allocation2] sm:$0x1]
    %v1398 = vlaneseq
    %v1399 = vshrl.u32 %v1398, 7
    %v1400 = vsub.s32 0, %v1399
    %v1401 = vrot.slane %v1396, %v1400
    %v1404 = vsel %vm80, %v1391, 0
    %1406 = vmatprep.subr.mxu0 0.0
    %1407 = vmatpush1.msra.mxu0 %v1392
    %1408 = vmatprep.subr.mxu0 0.0
    %1409 = vmatpush1.msra.mxu0 %v1393
    %1410 = vmatprep.subr.mxu0 0.0
    %1411 = vmatpush1.msra.mxu0 %v1394
    %1412 = vmatprep.subr.mxu0 0.0
    %1413 = vmatpush1.msra.mxu0 %v1395
    %1414 = vmatprep.subr.mxu0 0.0
    %1415 = vmatpush1.msra.mxu0 0.0
    %1416 = vmatprep.subr.mxu0 0.0
    %1417 = vmatpush1.msra.mxu0 0.0
    %1418 = vmatprep.subr.mxu0 0.0
    %1419 = vmatpush1.msra.mxu0 0.0
    %1420 = vmatprep.subr.mxu0 0.0
    %1421 = vmatpush1.msra.mxu0 0.0
    %1422 = vmatprep.subr.mxu0 0.0
    %1423 = vmatpush1.msra.mxu0 0.0
    %1424 = vmatprep.subr.mxu0 0.0
    %1425 = vmatpush1.msra.mxu0 0.0
    %1426 = vmatprep.subr.mxu0 0.0
    %1427 = vmatpush1.msra.mxu0 0.0
    %1428 = vmatprep.subr.mxu0 0.0
    %1429 = vmatpush1.msra.mxu0 0.0
    %1430 = vmatprep.subr.mxu0 0.0
    %1431 = vmatpush1.msra.mxu0 0.0
    %1432 = vmatprep.subr.mxu0 0.0
    %1433 = vmatpush1.msra.mxu0 0.0
    %1434 = vmatprep.subr.mxu0 0.0
    %1435 = vmatpush1.msra.mxu0 0.0
    %1436 = vmatprep.subr.mxu0 0.0
    %1437 = vmatpush1.msra.mxu0 0.0
    %1438 = vmatprep.subr.mxu0 0.0
    %1439 = vmatpush1.msra.mxu0 0.0
    %1440 = vmatprep.subr.mxu0 0.0
    %1441 = vmatpush1.msra.mxu0 0.0
    %1442 = vmatprep.subr.mxu0 0.0
    %1443 = vmatpush1.msra.mxu0 0.0
    %1444 = vmatprep.subr.mxu0 0.0
    %1445 = vmatpush1.msra.mxu0 0.0
    %1446 = vmatprep.subr.mxu0 0.0
    %1447 = vmatpush1.msra.mxu0 0.0
    %1448 = vmatprep.subr.mxu0 0.0
    %1449 = vmatpush1.msra.mxu0 0.0
    %1450 = vmatprep.subr.mxu0 0.0
    %1451 = vmatpush1.msra.mxu0 0.0
    %1452 = vmatprep.subr.mxu0 0.0
    %1453 = vmatpush1.msra.mxu0 0.0
    %1454 = vmatprep.subr.mxu0 0.0
    %1455 = vmatpush1.msra.mxu0 0.0
    %1456 = vmatprep.subr.mxu0 0.0
    %1457 = vmatpush1.msra.mxu0 0.0
    %1458 = vmatprep.subr.mxu0 0.0
    %1459 = vmatpush1.msra.mxu0 0.0
    %1460 = vmatprep.subr.mxu0 0.0
    %1461 = vmatpush1.msra.mxu0 0.0
    %1462 = vmatprep.subr.mxu0 0.0
    %1463 = vmatpush1.msra.mxu0 0.0
    %1464 = vmatprep.subr.mxu0 0.0
    %1465 = vmatpush1.msra.mxu0 0.0
    %1466 = vmatprep.subr.mxu0 0.0
    %1467 = vmatpush1.msra.mxu0 0.0
    %1468 = vmatprep.subr.mxu0 0.0
    %1469 = vmatpush1.msra.mxu0 0.0
    %1470 = vmatprep.mubr.f32.mxu0 0.0
    %1471 = vmatmul.mubr.f32.gmra.mrb[0].mxu0 %v1404
    %v1472 = vpop.f32.mrb[0].mxu0
    %v1473 = vadd.f32 %v1401, %v1472
    %v1474 = vpop.f32.mrb[0].mxu0
    %1475 = vdwg.mxu0
    %vm1476 = vcmask 7168
    %1477 = vst.msk [vmem:[%s9] sm:$0xff] %vm1476, %v1473
    // Predicated region
    $region50: #{tpu_custom_call.1} parent=1 // pred_check
      _
    $region51: #{tpu_custom_call.1} parent=1 // pred_check_branch
      %1479 = sbr.rel (0) target = $region53
    $region52: #{tpu_custom_call.1} parent=1 // pred_region
      _
    $region53: #{tpu_custom_call.1} parent=1 // pred_fallthru
      _
    // Predicated region
    $region54: #{tpu_custom_call.1} parent=1 // pred_check
      _
    $region55: #{tpu_custom_call.1} parent=1 // pred_check_branch
      %1481 = sbr.rel (0) target = $region57
    $region56: #{tpu_custom_call.1} parent=1 // pred_region
      _
    $region57: #{tpu_custom_call.1} parent=1 // pred_fallthru
      _
    %1482 = vsyncpa [#allocation4], 1
    %1483 = vsyncpa [#allocation6], 1

</llo_original>
